<compile_context>
chip_gen: v6e
topology: v6e:2x2x1
jax: 0.10.0
libtpu: 0.0.40
codegen_flags: <defaults>
</compile_context>

<pallas_src>
import functools

import jax
import jax.numpy as jnp
import numpy as np
from jax import lax
from jax.experimental import pallas as pl
from jax.experimental.pallas import tpu as pltpu


def _gnn_fused_kernel(
    esrc_ref, edst_ref, edst_row_ref, state_in_ref, edge_feat_ref,
    wa1s_ref, wa1e_ref, ba1_ref, w2p_ref, b2p_ref,
    wih_ref, whh_ref, bih_ref, bhh_ref,
    out_ref,
    *, num_layer, num_prop, has_residual,
):
    """Fused GNN forward: all layers and prop steps in one kernel invocation."""
    f32 = jnp.float32
    bf16 = jnp.bfloat16
    N = state_in_ref.shape[0]
    M = edge_feat_ref.shape[0]

    # --- One-hot gather / scatter operators, built ONCE and in bf16 (values
    # {-1, 0, +1} are exactly representable).  diff_oh @ x == x[src] - x[dst].
    iota_mn = lax.broadcasted_iota(jnp.int32, (M, N), 1)
    src_m = iota_mn == esrc_ref[...]
    dst_m = iota_mn == edst_ref[...]
    # Subtract (rather than a single nested select) so self-loop edges
    # (src == dst) correctly produce an all-zero row, matching the reference.
    diff_oh = src_m.astype(bf16) - dst_m.astype(bf16)                  # (M, N)
    # Scatter-add operator built directly in (N, M) orientation -> no transpose.
    iota_nm = lax.broadcasted_iota(jnp.int32, (N, M), 0)
    dst_oh_t = (iota_nm == edst_row_ref[...]).astype(bf16)             # (N, M)
    # NOTE: edge indices >= N are silently dropped (all-zero one-hot row); the
    # PyTorch reference would raise an out-of-bounds error instead.

    edge_feat_b = edge_feat_ref[...]                                   # (M, De) bf16
    state0 = state_in_ref[...].astype(f32)                             # (N, D)

    def layer_body(li, state):
        # ReLU between layers (not before the first one).
        state = jnp.where(li > 0, jnp.maximum(state, 0.0), state)

        # Per-layer weights: dynamic leading-axis loads from the stacked refs.
        wa1s = wa1s_ref[li]                    # (D,  msg+att) bf16
        wa1e = wa1e_ref[li]                    # (De, msg+att) bf16
        ba1 = ba1_ref[li]                      # (1,  msg+att) f32
        w2 = w2p_ref[2 * li]                   # (msg+att, msg) bf16  = [W2; 0]
        a2 = w2p_ref[2 * li + 1]               # (msg+att, msg) bf16  = [0; A2]
        b2 = b2p_ref[2 * li]                   # (1, msg) f32
        ab2 = b2p_ref[2 * li + 1]              # (1, msg) f32
        wih_r = wih_ref[3 * li]                # (msg, D) bf16  (torch order r,z,n)
        wih_z = wih_ref[3 * li + 1]
        wih_n = wih_ref[3 * li + 2]
        whh_r = whh_ref[3 * li]                # (D, D) bf16
        whh_z = whh_ref[3 * li + 1]
        whh_n = whh_ref[3 * li + 2]
        b_r = bih_ref[3 * li] + bhh_ref[3 * li]            # (1, D) f32
        b_z = bih_ref[3 * li + 1] + bhh_ref[3 * li + 1]
        bi_n = bih_ref[3 * li + 2]
        bh_n = bhh_ref[3 * li + 2]

        # Edge-feature contribution to the fused first MLP layer is constant
        # across all prop steps of this layer -> hoist out of the prop loop.
        ef_proj = jnp.dot(edge_feat_b, wa1e, preferred_element_type=f32) + ba1   # (M, msg+att)

        def prop_body(_, st):
            st_b = st.astype(bf16)
            # Reassociated gather + MLP1: project the (N, D) states first, then
            # apply the {-1,0,1} gather operator (fewer FLOPs since N << M).
            sproj = jnp.dot(st_b, wa1s, preferred_element_type=f32)              # (N, msg+att)
            h = jnp.maximum(
                jnp.dot(diff_oh, sproj.astype(bf16), preferred_element_type=f32)
                + ef_proj, 0.0)                                                  # (M, msg+att)
            h_b = h.astype(bf16)
            # msg / attention layer 2: two K-padded matmuls, no lane slicing.
            msg = jnp.dot(h_b, w2, preferred_element_type=f32) + b2              # (M, msg)
            att = jax.nn.sigmoid(jnp.dot(h_b, a2, preferred_element_type=f32) + ab2)
            msg = msg * att
            # scatter_add over destination nodes (operator already (N, M)).
            state_msg = jnp.dot(dst_oh_t, msg.astype(bf16),
                                preferred_element_type=f32)                      # (N, msg)
            sm_b = state_msg.astype(bf16)
            # GRUCell(state_msg, state): per-gate matmuls, elementwise in f32.
            r = jax.nn.sigmoid(jnp.dot(sm_b, wih_r, preferred_element_type=f32)
                               + jnp.dot(st_b, whh_r, preferred_element_type=f32)
                               + b_r)
            z = jax.nn.sigmoid(jnp.dot(sm_b, wih_z, preferred_element_type=f32)
                               + jnp.dot(st_b, whh_z, preferred_element_type=f32)
                               + b_z)
            n = jnp.tanh(jnp.dot(sm_b, wih_n, preferred_element_type=f32) + bi_n
                         + r * (jnp.dot(st_b, whh_n, preferred_element_type=f32)
                                + bh_n))
            return (1.0 - z) * n + z * st

        return lax.fori_loop(0, num_prop, prop_body, state,
                             unroll=num_prop <= 4)

    state = lax.fori_loop(0, num_layer, layer_body, state0)

    if has_residual:
        state = state + state_in_ref[...].astype(f32)
    # TODO(synk): has_graph_output head (graph-level attention-weighted
    # scatter-mean) not implemented; it defaults to False in the module.
    out_ref[...] = state.astype(out_ref.dtype)


def _prepare_fused_params(params, D):
    """Fuse, K-pad, stack and bf16-cast per-layer weights once (outside loops)."""
    bf16, f32 = jnp.bfloat16, jnp.float32
    wa1s, wa1e, ba1 = [], [], []
    w2p, b2p = [], []
    wih, whh, bih, bhh = [], [], [], []
    for p in params:
        W1, A1 = p["W1"], p["A1"]
        wa1s.append(jnp.concatenate([W1[:D], A1[:D]], axis=1).astype(bf16))
        wa1e.append(jnp.concatenate([W1[D:], A1[D:]], axis=1).astype(bf16))
        ba1.append(jnp.concatenate([p["b1"], p["ab1"]])[None, :].astype(f32))
        W2, A2 = p["W2"], p["A2"]
        m_out = W2.shape[1]
        # K-padded layer-2 weights: both consume the fused (msg+att) hidden,
        # so the hidden is never sliced inside a 128-lane tile.
        w2p.append(jnp.concatenate(
            [W2, jnp.zeros((A2.shape[0], m_out), W2.dtype)], axis=0).astype(bf16))
        w2p.append(jnp.concatenate(
            [jnp.zeros((W2.shape[0], m_out), A2.dtype), A2], axis=0).astype(bf16))
        b2p.append(p["b2"][None, :].astype(f32))
        b2p.append(p["ab2"][None, :].astype(f32))
        Wih, Whh = p["Wih"], p["Whh"]
        for g in range(3):                       # torch gate order r, z, n
            sl = slice(g * D, (g + 1) * D)
            wih.append(Wih[:, sl].astype(bf16))
            whh.append(Whh[:, sl].astype(bf16))
            bih.append(p["bih"][None, sl].astype(f32))
            bhh.append(p["bhh"][None, sl].astype(f32))
    st = jnp.stack
    return (st(wa1s), st(wa1e), st(ba1), st(w2p), st(b2p),
            st(wih), st(whh), st(bih), st(bhh))


def gnn_forward(params, node_feat, edge, edge_feat, *, num_layer, num_prop,
                node_state_dim, msg_dim, has_residual=False):
    """Entire GNN forward (all layers x prop steps) in one pallas_call."""
    del msg_dim  # implied by the weight shapes
    D = node_state_dim
    fused = _prepare_fused_params(params, D)

    edge = edge.astype(jnp.int32)
    esrc = edge[:, 0:1]               # (M, 1)
    edst = edge[:, 1:2]               # (M, 1)
    edst_row = edge[:, 1][None, :]    # (1, M) lane-contiguous for the (N, M) compare

    args = (esrc, edst, edst_row, node_feat,
            edge_feat.astype(jnp.bfloat16)) + fused
    kernel = functools.partial(
        _gnn_fused_kernel, num_layer=num_layer, num_prop=num_prop,
        has_residual=has_residual)

    return pl.pallas_call(
        kernel,
        out_shape=jax.ShapeDtypeStruct(node_feat.shape, node_feat.dtype),
        in_specs=[pl.BlockSpec(memory_space=pltpu.MemorySpace.VMEM)] * len(args),
        out_specs=pl.BlockSpec(memory_space=pltpu.MemorySpace.VMEM),
    )(*args)


def gnn_forward_ref(params, node_feat, edge, edge_feat, *, num_layer, num_prop,
                    node_state_dim, msg_dim, has_residual=False):
    """Pure-JAX f32 reference matching the PyTorch forward."""
    D = node_state_dim

    def prop(state, lp):
        diff = state[edge[:, 0], :] - state[edge[:, 1], :]
        ei = jnp.concatenate([diff, edge_feat], axis=1)
        h = jax.nn.relu(ei @ lp["W1"] + lp["b1"])
        msg = h @ lp["W2"] + lp["b2"]
        ah = jax.nn.relu(ei @ lp["A1"] + lp["ab1"])
        att = jax.nn.sigmoid(ah @ lp["A2"] + lp["ab2"])
        msg = msg * att
        state_msg = jnp.zeros((state.shape[0], msg_dim), state.dtype)
        state_msg = state_msg.at[edge[:, 1]].add(msg)
        gi = state_msg @ lp["Wih"] + lp["bih"]
        gh = state @ lp["Whh"] + lp["bhh"]
        r = jax.nn.sigmoid(gi[:, :D] + gh[:, :D])
        z = jax.nn.sigmoid(gi[:, D:2 * D] + gh[:, D:2 * D])
        n = jnp.tanh(gi[:, 2 * D:] + r * gh[:, 2 * D:])
        return (1.0 - z) * n + z * state

    state = node_feat
    prev_state = state
    for ii in range(num_layer):
        if ii > 0:
            state = jax.nn.relu(state)
        for _ in range(num_prop):
            state = prop(state, params[ii])
    if has_residual:
        state = state + prev_state
    return state


def init_params(key, *, num_layer, node_state_dim, edge_feat_dim, msg_dim,
                att_hidden_dim):
    """Deterministic synthetic parameters (kernel layout: W is (in, out))."""
    D, De = node_state_dim, edge_feat_dim
    params = []
    for _ in range(num_layer):
        ks = jax.random.split(key, 9)
        key = ks[0]
        lp = {
            "W1": 0.2 * jax.random.normal(ks[1], (D + De, msg_dim), jnp.float32),
            "b1": 0.1 * jax.random.normal(ks[2], (msg_dim,), jnp.float32),
            "W2": 0.2 * jax.random.normal(ks[3], (msg_dim, msg_dim), jnp.float32),
            "b2": 0.1 * jax.random.normal(ks[4], (msg_dim,), jnp.float32),
            "A1": 0.2 * jax.random.normal(ks[5], (D + De, att_hidden_dim), jnp.float32),
            "ab1": 0.1 * jax.random.normal(ks[6], (att_hidden_dim,), jnp.float32),
            "A2": 0.2 * jax.random.normal(ks[7], (att_hidden_dim, msg_dim), jnp.float32),
            "ab2": 0.1 * jax.random.normal(ks[8], (msg_dim,), jnp.float32),
        }
        kg = jax.random.split(key, 5)
        key = kg[0]
        lp["Wih"] = 0.2 * jax.random.normal(kg[1], (msg_dim, 3 * D), jnp.float32)
        lp["Whh"] = 0.2 * jax.random.normal(kg[2], (D, 3 * D), jnp.float32)
        lp["bih"] = 0.1 * jax.random.normal(kg[3], (3 * D,), jnp.float32)
        lp["bhh"] = 0.1 * jax.random.normal(kg[4], (3 * D,), jnp.float32)
        params.append(lp)
    return params


if __name__ == "__main__":
    # Two small graphs merged into one node set (the module's "merge a batch of
    # graphs as a single graph" convention) so one pallas_call handles both.
    n_per_graph, m_per_graph, n_graphs = 16, 48, 2
    N = n_per_graph * n_graphs
    node_state_dim = 32            # D (node_feat is N x D)
    msg_dim = 32
    edge_feat_dim = 8
    att_hidden_dim = 32
    num_layer = 2
    num_prop = 2

    key = jax.random.PRNGKey(0)
    k_feat, k_efeat, k_par, *k_edges = jax.random.split(key, 3 + n_graphs)
    node_feat = jax.random.normal(k_feat, (N, node_state_dim), jnp.float32)
    edge = jnp.concatenate(
        [jax.random.randint(k_edges[g], (m_per_graph, 2), 0, n_per_graph,
                            dtype=jnp.int32) + g * n_per_graph
         for g in range(n_graphs)], axis=0)
    edge_feat = jax.random.normal(k_efeat, (edge.shape[0], edge_feat_dim),
                                  jnp.float32)

    params = init_params(
        k_par, num_layer=num_layer, node_state_dim=node_state_dim,
        edge_feat_dim=edge_feat_dim, msg_dim=msg_dim,
        att_hidden_dim=att_hidden_dim)

    fwd = functools.partial(
        gnn_forward, num_layer=num_layer, num_prop=num_prop,
        node_state_dim=node_state_dim, msg_dim=msg_dim, has_residual=False)
    out = jax.jit(fwd)(params, node_feat, edge, edge_feat)
    out = jax.block_until_ready(out)

    ref = gnn_forward_ref(
        params, node_feat, edge, edge_feat, num_layer=num_layer,
        num_prop=num_prop, node_state_dim=node_state_dim, msg_dim=msg_dim,
        has_residual=False)
    # bf16 MXU operands (f32 accumulation) vs. the pure-f32 reference: use a
    # correspondingly looser tolerance than the previous all-f32 kernel.
    np.testing.assert_allclose(np.asarray(out), np.asarray(ref),
                               rtol=5e-2, atol=5e-2)

    print("KERNEL_OK")
</pallas_src>

<mosaic_0001>
module attributes {stable_mosaic.version = 11 : i64} {
  func.func @_gnn_fused_kernel(%arg0: memref<96x1xi32, #tpu.memory_space<vmem>>, %arg1: memref<96x1xi32, #tpu.memory_space<vmem>>, %arg2: memref<1x96xi32, #tpu.memory_space<vmem>>, %arg3: memref<32x32xf32, #tpu.memory_space<vmem>>, %arg4: memref<96x8xbf16, #tpu.memory_space<vmem>>, %arg5: memref<2x32x64xbf16, #tpu.memory_space<vmem>>, %arg6: memref<2x8x64xbf16, #tpu.memory_space<vmem>>, %arg7: memref<2x1x64xf32, #tpu.memory_space<vmem>>, %arg8: memref<4x64x32xbf16, #tpu.memory_space<vmem>>, %arg9: memref<4x1x32xf32, #tpu.memory_space<vmem>>, %arg10: memref<6x32x32xbf16, #tpu.memory_space<vmem>>, %arg11: memref<6x32x32xbf16, #tpu.memory_space<vmem>>, %arg12: memref<6x1x32xf32, #tpu.memory_space<vmem>>, %arg13: memref<6x1x32xf32, #tpu.memory_space<vmem>>, %arg14: memref<32x32xf32, #tpu.memory_space<vmem>>) attributes {dimension_semantics = [], scalar_prefetch = 0 : i64, scratch_operands = 0 : i64, tpu.core_type = #tpu.core_type<tc>} {
    %0 = tpu.iota {dimensions = array<i32: 1>} : vector<96x32xi32>
    %c0 = arith.constant 0 : index
    %c0_0 = arith.constant 0 : index
    %1 = vector.load %arg0[%c0, %c0_0] : memref<96x1xi32, #tpu.memory_space<vmem>>, vector<96x1xi32>
    %2 = vector.broadcast %1 : vector<96x1xi32> to vector<96x32xi32>
    %3 = arith.cmpi eq, %0, %2 : vector<96x32xi32>
    %c0_1 = arith.constant 0 : index
    %c0_2 = arith.constant 0 : index
    %4 = vector.load %arg1[%c0_1, %c0_2] : memref<96x1xi32, #tpu.memory_space<vmem>>, vector<96x1xi32>
    %5 = vector.broadcast %4 : vector<96x1xi32> to vector<96x32xi32>
    %6 = arith.cmpi eq, %0, %5 : vector<96x32xi32>
    %7 = arith.extui %3 : vector<96x32xi1> to vector<96x32xi32>
    %8 = arith.sitofp %7 : vector<96x32xi32> to vector<96x32xf32>
    %9 = arith.truncf %8 : vector<96x32xf32> to vector<96x32xbf16>
    %10 = arith.extui %6 : vector<96x32xi1> to vector<96x32xi32>
    %11 = arith.sitofp %10 : vector<96x32xi32> to vector<96x32xf32>
    %12 = arith.truncf %11 : vector<96x32xf32> to vector<96x32xbf16>
    %13 = arith.subf %9, %12 : vector<96x32xbf16>
    %14 = tpu.iota {dimensions = array<i32: 0>} : vector<32x96xi32>
    %c0_3 = arith.constant 0 : index
    %c0_4 = arith.constant 0 : index
    %15 = vector.load %arg2[%c0_3, %c0_4] : memref<1x96xi32, #tpu.memory_space<vmem>>, vector<1x96xi32>
    %16 = vector.broadcast %15 : vector<1x96xi32> to vector<32x96xi32>
    %17 = arith.cmpi eq, %14, %16 : vector<32x96xi32>
    %18 = arith.extui %17 : vector<32x96xi1> to vector<32x96xi32>
    %19 = arith.sitofp %18 : vector<32x96xi32> to vector<32x96xf32>
    %20 = arith.truncf %19 : vector<32x96xf32> to vector<32x96xbf16>
    %c0_5 = arith.constant 0 : index
    %c0_6 = arith.constant 0 : index
    %21 = vector.load %arg4[%c0_5, %c0_6] : memref<96x8xbf16, #tpu.memory_space<vmem>>, vector<96x8xbf16>
    %c0_7 = arith.constant 0 : index
    %c0_8 = arith.constant 0 : index
    %22 = vector.load %arg3[%c0_7, %c0_8] : memref<32x32xf32, #tpu.memory_space<vmem>>, vector<32x32xf32>
    %c0_i32 = arith.constant 0 : i32
    %c2_i32 = arith.constant 2 : i32
    %23 = arith.addi %c0_i32, %c2_i32 : i32
    %c1_i32 = arith.constant 1 : i32
    %24 = scf.for %arg15 = %c0_i32 to %23 step %c1_i32 iter_args(%arg16 = %22) -> (vector<32x32xf32>)  : i32 {
      %c0_i32_12 = arith.constant 0 : i32
      %26 = arith.cmpi sgt, %arg15, %c0_i32_12 : i32
      %cst = arith.constant 0.000000e+00 : f32
      %27 = vector.broadcast %cst : f32 to vector<32x32xf32>
      %28 = arith.maximumf %arg16, %27 : vector<32x32xf32>
      %29 = arith.select %26, %28, %arg16 : vector<32x32xf32>
      %30 = arith.index_cast %arg15 : i32 to index
      %c0_13 = arith.constant 0 : index
      %c0_14 = arith.constant 0 : index
      %31 = vector.load %arg5[%30, %c0_13, %c0_14] : memref<2x32x64xbf16, #tpu.memory_space<vmem>>, vector<1x32x64xbf16>
      %32 = vector.shape_cast %31 : vector<1x32x64xbf16> to vector<32x64xbf16>
      %33 = arith.index_cast %arg15 : i32 to index
      %c0_15 = arith.constant 0 : index
      %c0_16 = arith.constant 0 : index
      %34 = vector.load %arg6[%33, %c0_15, %c0_16] : memref<2x8x64xbf16, #tpu.memory_space<vmem>>, vector<1x8x64xbf16>
      %35 = vector.shape_cast %34 : vector<1x8x64xbf16> to vector<8x64xbf16>
      %36 = arith.index_cast %arg15 : i32 to index
      %c0_17 = arith.constant 0 : index
      %c0_18 = arith.constant 0 : index
      %37 = vector.load %arg7[%36, %c0_17, %c0_18] : memref<2x1x64xf32, #tpu.memory_space<vmem>>, vector<1x1x64xf32>
      %38 = vector.shape_cast %37 : vector<1x1x64xf32> to vector<1x64xf32>
      %c2_i32_19 = arith.constant 2 : i32
      %39 = arith.muli %c2_i32_19, %arg15 : i32
      %40 = arith.index_cast %39 : i32 to index
      %c0_20 = arith.constant 0 : index
      %c0_21 = arith.constant 0 : index
      %41 = vector.load %arg8[%40, %c0_20, %c0_21] : memref<4x64x32xbf16, #tpu.memory_space<vmem>>, vector<1x64x32xbf16>
      %42 = vector.shape_cast %41 : vector<1x64x32xbf16> to vector<64x32xbf16>
      %c2_i32_22 = arith.constant 2 : i32
      %43 = arith.muli %c2_i32_22, %arg15 : i32
      %c1_i32_23 = arith.constant 1 : i32
      %44 = arith.addi %43, %c1_i32_23 : i32
      %45 = arith.index_cast %44 : i32 to index
      %c0_24 = arith.constant 0 : index
      %c0_25 = arith.constant 0 : index
      %46 = vector.load %arg8[%45, %c0_24, %c0_25] : memref<4x64x32xbf16, #tpu.memory_space<vmem>>, vector<1x64x32xbf16>
      %47 = vector.shape_cast %46 : vector<1x64x32xbf16> to vector<64x32xbf16>
      %c2_i32_26 = arith.constant 2 : i32
      %48 = arith.muli %c2_i32_26, %arg15 : i32
      %49 = arith.index_cast %48 : i32 to index
      %c0_27 = arith.constant 0 : index
      %c0_28 = arith.constant 0 : index
      %50 = vector.load %arg9[%49, %c0_27, %c0_28] : memref<4x1x32xf32, #tpu.memory_space<vmem>>, vector<1x1x32xf32>
      %51 = vector.shape_cast %50 : vector<1x1x32xf32> to vector<1x32xf32>
      %c2_i32_29 = arith.constant 2 : i32
      %52 = arith.muli %c2_i32_29, %arg15 : i32
      %c1_i32_30 = arith.constant 1 : i32
      %53 = arith.addi %52, %c1_i32_30 : i32
      %54 = arith.index_cast %53 : i32 to index
      %c0_31 = arith.constant 0 : index
      %c0_32 = arith.constant 0 : index
      %55 = vector.load %arg9[%54, %c0_31, %c0_32] : memref<4x1x32xf32, #tpu.memory_space<vmem>>, vector<1x1x32xf32>
      %56 = vector.shape_cast %55 : vector<1x1x32xf32> to vector<1x32xf32>
      %c3_i32 = arith.constant 3 : i32
      %57 = arith.muli %c3_i32, %arg15 : i32
      %58 = arith.index_cast %57 : i32 to index
      %c0_33 = arith.constant 0 : index
      %c0_34 = arith.constant 0 : index
      %59 = vector.load %arg10[%58, %c0_33, %c0_34] : memref<6x32x32xbf16, #tpu.memory_space<vmem>>, vector<1x32x32xbf16>
      %60 = vector.shape_cast %59 : vector<1x32x32xbf16> to vector<32x32xbf16>
      %c3_i32_35 = arith.constant 3 : i32
      %61 = arith.muli %c3_i32_35, %arg15 : i32
      %c1_i32_36 = arith.constant 1 : i32
      %62 = arith.addi %61, %c1_i32_36 : i32
      %63 = arith.index_cast %62 : i32 to index
      %c0_37 = arith.constant 0 : index
      %c0_38 = arith.constant 0 : index
      %64 = vector.load %arg10[%63, %c0_37, %c0_38] : memref<6x32x32xbf16, #tpu.memory_space<vmem>>, vector<1x32x32xbf16>
      %65 = vector.shape_cast %64 : vector<1x32x32xbf16> to vector<32x32xbf16>
      %c3_i32_39 = arith.constant 3 : i32
      %66 = arith.muli %c3_i32_39, %arg15 : i32
      %c2_i32_40 = arith.constant 2 : i32
      %67 = arith.addi %66, %c2_i32_40 : i32
      %68 = arith.index_cast %67 : i32 to index
      %c0_41 = arith.constant 0 : index
      %c0_42 = arith.constant 0 : index
      %69 = vector.load %arg10[%68, %c0_41, %c0_42] : memref<6x32x32xbf16, #tpu.memory_space<vmem>>, vector<1x32x32xbf16>
      %70 = vector.shape_cast %69 : vector<1x32x32xbf16> to vector<32x32xbf16>
      %c3_i32_43 = arith.constant 3 : i32
      %71 = arith.muli %c3_i32_43, %arg15 : i32
      %72 = arith.index_cast %71 : i32 to index
      %c0_44 = arith.constant 0 : index
      %c0_45 = arith.constant 0 : index
      %73 = vector.load %arg11[%72, %c0_44, %c0_45] : memref<6x32x32xbf16, #tpu.memory_space<vmem>>, vector<1x32x32xbf16>
      %74 = vector.shape_cast %73 : vector<1x32x32xbf16> to vector<32x32xbf16>
      %c3_i32_46 = arith.constant 3 : i32
      %75 = arith.muli %c3_i32_46, %arg15 : i32
      %c1_i32_47 = arith.constant 1 : i32
      %76 = arith.addi %75, %c1_i32_47 : i32
      %77 = arith.index_cast %76 : i32 to index
      %c0_48 = arith.constant 0 : index
      %c0_49 = arith.constant 0 : index
      %78 = vector.load %arg11[%77, %c0_48, %c0_49] : memref<6x32x32xbf16, #tpu.memory_space<vmem>>, vector<1x32x32xbf16>
      %79 = vector.shape_cast %78 : vector<1x32x32xbf16> to vector<32x32xbf16>
      %c3_i32_50 = arith.constant 3 : i32
      %80 = arith.muli %c3_i32_50, %arg15 : i32
      %c2_i32_51 = arith.constant 2 : i32
      %81 = arith.addi %80, %c2_i32_51 : i32
      %82 = arith.index_cast %81 : i32 to index
      %c0_52 = arith.constant 0 : index
      %c0_53 = arith.constant 0 : index
      %83 = vector.load %arg11[%82, %c0_52, %c0_53] : memref<6x32x32xbf16, #tpu.memory_space<vmem>>, vector<1x32x32xbf16>
      %84 = vector.shape_cast %83 : vector<1x32x32xbf16> to vector<32x32xbf16>
      %c3_i32_54 = arith.constant 3 : i32
      %85 = arith.muli %c3_i32_54, %arg15 : i32
      %86 = arith.index_cast %85 : i32 to index
      %c0_55 = arith.constant 0 : index
      %c0_56 = arith.constant 0 : index
      %87 = vector.load %arg12[%86, %c0_55, %c0_56] : memref<6x1x32xf32, #tpu.memory_space<vmem>>, vector<1x1x32xf32>
      %88 = vector.shape_cast %87 : vector<1x1x32xf32> to vector<1x32xf32>
      %c3_i32_57 = arith.constant 3 : i32
      %89 = arith.muli %c3_i32_57, %arg15 : i32
      %90 = arith.index_cast %89 : i32 to index
      %c0_58 = arith.constant 0 : index
      %c0_59 = arith.constant 0 : index
      %91 = vector.load %arg13[%90, %c0_58, %c0_59] : memref<6x1x32xf32, #tpu.memory_space<vmem>>, vector<1x1x32xf32>
      %92 = vector.shape_cast %91 : vector<1x1x32xf32> to vector<1x32xf32>
      %93 = arith.addf %88, %92 : vector<1x32xf32>
      %c3_i32_60 = arith.constant 3 : i32
      %94 = arith.muli %c3_i32_60, %arg15 : i32
      %c1_i32_61 = arith.constant 1 : i32
      %95 = arith.addi %94, %c1_i32_61 : i32
      %96 = arith.index_cast %95 : i32 to index
      %c0_62 = arith.constant 0 : index
      %c0_63 = arith.constant 0 : index
      %97 = vector.load %arg12[%96, %c0_62, %c0_63] : memref<6x1x32xf32, #tpu.memory_space<vmem>>, vector<1x1x32xf32>
      %98 = vector.shape_cast %97 : vector<1x1x32xf32> to vector<1x32xf32>
      %c3_i32_64 = arith.constant 3 : i32
      %99 = arith.muli %c3_i32_64, %arg15 : i32
      %c1_i32_65 = arith.constant 1 : i32
      %100 = arith.addi %99, %c1_i32_65 : i32
      %101 = arith.index_cast %100 : i32 to index
      %c0_66 = arith.constant 0 : index
      %c0_67 = arith.constant 0 : index
      %102 = vector.load %arg13[%101, %c0_66, %c0_67] : memref<6x1x32xf32, #tpu.memory_space<vmem>>, vector<1x1x32xf32>
      %103 = vector.shape_cast %102 : vector<1x1x32xf32> to vector<1x32xf32>
      %104 = arith.addf %98, %103 : vector<1x32xf32>
      %c3_i32_68 = arith.constant 3 : i32
      %105 = arith.muli %c3_i32_68, %arg15 : i32
      %c2_i32_69 = arith.constant 2 : i32
      %106 = arith.addi %105, %c2_i32_69 : i32
      %107 = arith.index_cast %106 : i32 to index
      %c0_70 = arith.constant 0 : index
      %c0_71 = arith.constant 0 : index
      %108 = vector.load %arg12[%107, %c0_70, %c0_71] : memref<6x1x32xf32, #tpu.memory_space<vmem>>, vector<1x1x32xf32>
      %109 = vector.shape_cast %108 : vector<1x1x32xf32> to vector<1x32xf32>
      %c3_i32_72 = arith.constant 3 : i32
      %110 = arith.muli %c3_i32_72, %arg15 : i32
      %c2_i32_73 = arith.constant 2 : i32
      %111 = arith.addi %110, %c2_i32_73 : i32
      %112 = arith.index_cast %111 : i32 to index
      %c0_74 = arith.constant 0 : index
      %c0_75 = arith.constant 0 : index
      %113 = vector.load %arg13[%112, %c0_74, %c0_75] : memref<6x1x32xf32, #tpu.memory_space<vmem>>, vector<1x1x32xf32>
      %114 = vector.shape_cast %113 : vector<1x1x32xf32> to vector<1x32xf32>
      %cst_76 = arith.constant dense<0.000000e+00> : vector<96x64xf32>
      %115 = tpu.matmul %21, %35, %cst_76 {dimension_numbers = #tpu.dot_dimension_numbers<[1], [0], [0], [1], [0, 0, 1, 1], [], []>} : vector<96x8xbf16>, vector<8x64xbf16>, vector<96x64xf32> -> vector<96x64xf32>
      %116 = vector.broadcast %38 : vector<1x64xf32> to vector<96x64xf32>
      %117 = arith.addf %115, %116 : vector<96x64xf32>
      %c0_i32_77 = arith.constant 0 : i32
      %118 = arith.truncf %29 : vector<32x32xf32> to vector<32x32xbf16>
      %cst_78 = arith.constant dense<0.000000e+00> : vector<32x64xf32>
      %119 = tpu.matmul %118, %32, %cst_78 {dimension_numbers = #tpu.dot_dimension_numbers<[1], [0], [0], [1], [0, 0, 1, 1], [], []>} : vector<32x32xbf16>, vector<32x64xbf16>, vector<32x64xf32> -> vector<32x64xf32>
      %120 = arith.truncf %119 : vector<32x64xf32> to vector<32x64xbf16>
      %cst_79 = arith.constant dense<0.000000e+00> : vector<96x64xf32>
      %121 = tpu.matmul %13, %120, %cst_79 {dimension_numbers = #tpu.dot_dimension_numbers<[1], [0], [0], [1], [0, 0, 1, 1], [], []>} : vector<96x32xbf16>, vector<32x64xbf16>, vector<96x64xf32> -> vector<96x64xf32>
      %122 = arith.addf %121, %117 : vector<96x64xf32>
      %cst_80 = arith.constant 0.000000e+00 : f32
      %123 = vector.broadcast %cst_80 : f32 to vector<96x64xf32>
      %124 = arith.maximumf %122, %123 : vector<96x64xf32>
      %125 = arith.truncf %124 : vector<96x64xf32> to vector<96x64xbf16>
      %cst_81 = arith.constant dense<0.000000e+00> : vector<96x32xf32>
      %126 = tpu.matmul %125, %42, %cst_81 {dimension_numbers = #tpu.dot_dimension_numbers<[1], [0], [0], [1], [0, 0, 1, 1], [], []>} : vector<96x64xbf16>, vector<64x32xbf16>, vector<96x32xf32> -> vector<96x32xf32>
      %127 = vector.broadcast %51 : vector<1x32xf32> to vector<96x32xf32>
      %128 = arith.addf %126, %127 : vector<96x32xf32>
      %cst_82 = arith.constant dense<0.000000e+00> : vector<96x32xf32>
      %129 = tpu.matmul %125, %47, %cst_82 {dimension_numbers = #tpu.dot_dimension_numbers<[1], [0], [0], [1], [0, 0, 1, 1], [], []>} : vector<96x64xbf16>, vector<64x32xbf16>, vector<96x32xf32> -> vector<96x32xf32>
      %130 = vector.broadcast %56 : vector<1x32xf32> to vector<96x32xf32>
      %131 = arith.addf %129, %130 : vector<96x32xf32>
      %132 = arith.negf %131 : vector<96x32xf32>
      %133 = math.exp %132 : vector<96x32xf32>
      %cst_83 = arith.constant 1.000000e+00 : f32
      %134 = vector.broadcast %cst_83 : f32 to vector<96x32xf32>
      %135 = arith.addf %134, %133 : vector<96x32xf32>
      %136 = arith.divf %134, %135 : vector<96x32xf32>
      %137 = arith.mulf %128, %136 : vector<96x32xf32>
      %138 = arith.truncf %137 : vector<96x32xf32> to vector<96x32xbf16>
      %cst_84 = arith.constant dense<0.000000e+00> : vector<32x32xf32>
      %139 = tpu.matmul %20, %138, %cst_84 {dimension_numbers = #tpu.dot_dimension_numbers<[1], [0], [0], [1], [0, 0, 1, 1], [], []>} : vector<32x96xbf16>, vector<96x32xbf16>, vector<32x32xf32> -> vector<32x32xf32>
      %140 = arith.truncf %139 : vector<32x32xf32> to vector<32x32xbf16>
      %cst_85 = arith.constant dense<0.000000e+00> : vector<32x32xf32>
      %141 = tpu.matmul %140, %60, %cst_85 {dimension_numbers = #tpu.dot_dimension_numbers<[1], [0], [0], [1], [0, 0, 1, 1], [], []>} : vector<32x32xbf16>, vector<32x32xbf16>, vector<32x32xf32> -> vector<32x32xf32>
      %cst_86 = arith.constant dense<0.000000e+00> : vector<32x32xf32>
      %142 = tpu.matmul %118, %74, %cst_86 {dimension_numbers = #tpu.dot_dimension_numbers<[1], [0], [0], [1], [0, 0, 1, 1], [], []>} : vector<32x32xbf16>, vector<32x32xbf16>, vector<32x32xf32> -> vector<32x32xf32>
      %143 = arith.addf %141, %142 : vector<32x32xf32>
      %144 = vector.broadcast %93 : vector<1x32xf32> to vector<32x32xf32>
      %145 = arith.addf %143, %144 : vector<32x32xf32>
      %146 = arith.negf %145 : vector<32x32xf32>
      %147 = math.exp %146 : vector<32x32xf32>
      %cst_87 = arith.constant 1.000000e+00 : f32
      %148 = vector.broadcast %cst_87 : f32 to vector<32x32xf32>
      %149 = arith.addf %148, %147 : vector<32x32xf32>
      %150 = arith.divf %148, %149 : vector<32x32xf32>
      %cst_88 = arith.constant dense<0.000000e+00> : vector<32x32xf32>
      %151 = tpu.matmul %140, %65, %cst_88 {dimension_numbers = #tpu.dot_dimension_numbers<[1], [0], [0], [1], [0, 0, 1, 1], [], []>} : vector<32x32xbf16>, vector<32x32xbf16>, vector<32x32xf32> -> vector<32x32xf32>
      %cst_89 = arith.constant dense<0.000000e+00> : vector<32x32xf32>
      %152 = tpu.matmul %118, %79, %cst_89 {dimension_numbers = #tpu.dot_dimension_numbers<[1], [0], [0], [1], [0, 0, 1, 1], [], []>} : vector<32x32xbf16>, vector<32x32xbf16>, vector<32x32xf32> -> vector<32x32xf32>
      %153 = arith.addf %151, %152 : vector<32x32xf32>
      %154 = vector.broadcast %104 : vector<1x32xf32> to vector<32x32xf32>
      %155 = arith.addf %153, %154 : vector<32x32xf32>
      %156 = arith.negf %155 : vector<32x32xf32>
      %157 = math.exp %156 : vector<32x32xf32>
      %cst_90 = arith.constant 1.000000e+00 : f32
      %158 = vector.broadcast %cst_90 : f32 to vector<32x32xf32>
      %159 = arith.addf %158, %157 : vector<32x32xf32>
      %160 = arith.divf %158, %159 : vector<32x32xf32>
      %cst_91 = arith.constant dense<0.000000e+00> : vector<32x32xf32>
      %161 = tpu.matmul %140, %70, %cst_91 {dimension_numbers = #tpu.dot_dimension_numbers<[1], [0], [0], [1], [0, 0, 1, 1], [], []>} : vector<32x32xbf16>, vector<32x32xbf16>, vector<32x32xf32> -> vector<32x32xf32>
      %162 = vector.broadcast %109 : vector<1x32xf32> to vector<32x32xf32>
      %163 = arith.addf %161, %162 : vector<32x32xf32>
      %cst_92 = arith.constant dense<0.000000e+00> : vector<32x32xf32>
      %164 = tpu.matmul %118, %84, %cst_92 {dimension_numbers = #tpu.dot_dimension_numbers<[1], [0], [0], [1], [0, 0, 1, 1], [], []>} : vector<32x32xbf16>, vector<32x32xbf16>, vector<32x32xf32> -> vector<32x32xf32>
      %165 = vector.broadcast %114 : vector<1x32xf32> to vector<32x32xf32>
      %166 = arith.addf %164, %165 : vector<32x32xf32>
      %167 = arith.mulf %150, %166 : vector<32x32xf32>
      %168 = arith.addf %163, %167 : vector<32x32xf32>
      %169 = math.tanh %168 : vector<32x32xf32>
      %cst_93 = arith.constant 1.000000e+00 : f32
      %170 = vector.broadcast %cst_93 : f32 to vector<32x32xf32>
      %171 = arith.subf %170, %160 : vector<32x32xf32>
      %172 = arith.mulf %171, %169 : vector<32x32xf32>
      %173 = arith.mulf %160, %29 : vector<32x32xf32>
      %174 = arith.addf %172, %173 : vector<32x32xf32>
      %c1_i32_94 = arith.constant 1 : i32
      %175 = arith.truncf %174 : vector<32x32xf32> to vector<32x32xbf16>
      %cst_95 = arith.constant dense<0.000000e+00> : vector<32x64xf32>
      %176 = tpu.matmul %175, %32, %cst_95 {dimension_numbers = #tpu.dot_dimension_numbers<[1], [0], [0], [1], [0, 0, 1, 1], [], []>} : vector<32x32xbf16>, vector<32x64xbf16>, vector<32x64xf32> -> vector<32x64xf32>
      %177 = arith.truncf %176 : vector<32x64xf32> to vector<32x64xbf16>
      %cst_96 = arith.constant dense<0.000000e+00> : vector<96x64xf32>
      %178 = tpu.matmul %13, %177, %cst_96 {dimension_numbers = #tpu.dot_dimension_numbers<[1], [0], [0], [1], [0, 0, 1, 1], [], []>} : vector<96x32xbf16>, vector<32x64xbf16>, vector<96x64xf32> -> vector<96x64xf32>
      %179 = arith.addf %178, %117 : vector<96x64xf32>
      %cst_97 = arith.constant 0.000000e+00 : f32
      %180 = vector.broadcast %cst_97 : f32 to vector<96x64xf32>
      %181 = arith.maximumf %179, %180 : vector<96x64xf32>
      %182 = arith.truncf %181 : vector<96x64xf32> to vector<96x64xbf16>
      %cst_98 = arith.constant dense<0.000000e+00> : vector<96x32xf32>
      %183 = tpu.matmul %182, %42, %cst_98 {dimension_numbers = #tpu.dot_dimension_numbers<[1], [0], [0], [1], [0, 0, 1, 1], [], []>} : vector<96x64xbf16>, vector<64x32xbf16>, vector<96x32xf32> -> vector<96x32xf32>
      %184 = vector.broadcast %51 : vector<1x32xf32> to vector<96x32xf32>
      %185 = arith.addf %183, %184 : vector<96x32xf32>
      %cst_99 = arith.constant dense<0.000000e+00> : vector<96x32xf32>
      %186 = tpu.matmul %182, %47, %cst_99 {dimension_numbers = #tpu.dot_dimension_numbers<[1], [0], [0], [1], [0, 0, 1, 1], [], []>} : vector<96x64xbf16>, vector<64x32xbf16>, vector<96x32xf32> -> vector<96x32xf32>
      %187 = vector.broadcast %56 : vector<1x32xf32> to vector<96x32xf32>
      %188 = arith.addf %186, %187 : vector<96x32xf32>
      %189 = arith.negf %188 : vector<96x32xf32>
      %190 = math.exp %189 : vector<96x32xf32>
      %cst_100 = arith.constant 1.000000e+00 : f32
      %191 = vector.broadcast %cst_100 : f32 to vector<96x32xf32>
      %192 = arith.addf %191, %190 : vector<96x32xf32>
      %193 = arith.divf %191, %192 : vector<96x32xf32>
      %194 = arith.mulf %185, %193 : vector<96x32xf32>
      %195 = arith.truncf %194 : vector<96x32xf32> to vector<96x32xbf16>
      %cst_101 = arith.constant dense<0.000000e+00> : vector<32x32xf32>
      %196 = tpu.matmul %20, %195, %cst_101 {dimension_numbers = #tpu.dot_dimension_numbers<[1], [0], [0], [1], [0, 0, 1, 1], [], []>} : vector<32x96xbf16>, vector<96x32xbf16>, vector<32x32xf32> -> vector<32x32xf32>
      %197 = arith.truncf %196 : vector<32x32xf32> to vector<32x32xbf16>
      %cst_102 = arith.constant dense<0.000000e+00> : vector<32x32xf32>
      %198 = tpu.matmul %197, %60, %cst_102 {dimension_numbers = #tpu.dot_dimension_numbers<[1], [0], [0], [1], [0, 0, 1, 1], [], []>} : vector<32x32xbf16>, vector<32x32xbf16>, vector<32x32xf32> -> vector<32x32xf32>
      %cst_103 = arith.constant dense<0.000000e+00> : vector<32x32xf32>
      %199 = tpu.matmul %175, %74, %cst_103 {dimension_numbers = #tpu.dot_dimension_numbers<[1], [0], [0], [1], [0, 0, 1, 1], [], []>} : vector<32x32xbf16>, vector<32x32xbf16>, vector<32x32xf32> -> vector<32x32xf32>
      %200 = arith.addf %198, %199 : vector<32x32xf32>
      %201 = vector.broadcast %93 : vector<1x32xf32> to vector<32x32xf32>
      %202 = arith.addf %200, %201 : vector<32x32xf32>
      %203 = arith.negf %202 : vector<32x32xf32>
      %204 = math.exp %203 : vector<32x32xf32>
      %cst_104 = arith.constant 1.000000e+00 : f32
      %205 = vector.broadcast %cst_104 : f32 to vector<32x32xf32>
      %206 = arith.addf %205, %204 : vector<32x32xf32>
      %207 = arith.divf %205, %206 : vector<32x32xf32>
      %cst_105 = arith.constant dense<0.000000e+00> : vector<32x32xf32>
      %208 = tpu.matmul %197, %65, %cst_105 {dimension_numbers = #tpu.dot_dimension_numbers<[1], [0], [0], [1], [0, 0, 1, 1], [], []>} : vector<32x32xbf16>, vector<32x32xbf16>, vector<32x32xf32> -> vector<32x32xf32>
      %cst_106 = arith.constant dense<0.000000e+00> : vector<32x32xf32>
      %209 = tpu.matmul %175, %79, %cst_106 {dimension_numbers = #tpu.dot_dimension_numbers<[1], [0], [0], [1], [0, 0, 1, 1], [], []>} : vector<32x32xbf16>, vector<32x32xbf16>, vector<32x32xf32> -> vector<32x32xf32>
      %210 = arith.addf %208, %209 : vector<32x32xf32>
      %211 = vector.broadcast %104 : vector<1x32xf32> to vector<32x32xf32>
      %212 = arith.addf %210, %211 : vector<32x32xf32>
      %213 = arith.negf %212 : vector<32x32xf32>
      %214 = math.exp %213 : vector<32x32xf32>
      %cst_107 = arith.constant 1.000000e+00 : f32
      %215 = vector.broadcast %cst_107 : f32 to vector<32x32xf32>
      %216 = arith.addf %215, %214 : vector<32x32xf32>
      %217 = arith.divf %215, %216 : vector<32x32xf32>
      %cst_108 = arith.constant dense<0.000000e+00> : vector<32x32xf32>
      %218 = tpu.matmul %197, %70, %cst_108 {dimension_numbers = #tpu.dot_dimension_numbers<[1], [0], [0], [1], [0, 0, 1, 1], [], []>} : vector<32x32xbf16>, vector<32x32xbf16>, vector<32x32xf32> -> vector<32x32xf32>
      %219 = vector.broadcast %109 : vector<1x32xf32> to vector<32x32xf32>
      %220 = arith.addf %218, %219 : vector<32x32xf32>
      %cst_109 = arith.constant dense<0.000000e+00> : vector<32x32xf32>
      %221 = tpu.matmul %175, %84, %cst_109 {dimension_numbers = #tpu.dot_dimension_numbers<[1], [0], [0], [1], [0, 0, 1, 1], [], []>} : vector<32x32xbf16>, vector<32x32xbf16>, vector<32x32xf32> -> vector<32x32xf32>
      %222 = vector.broadcast %114 : vector<1x32xf32> to vector<32x32xf32>
      %223 = arith.addf %221, %222 : vector<32x32xf32>
      %224 = arith.mulf %207, %223 : vector<32x32xf32>
      %225 = arith.addf %220, %224 : vector<32x32xf32>
      %226 = math.tanh %225 : vector<32x32xf32>
      %cst_110 = arith.constant 1.000000e+00 : f32
      %227 = vector.broadcast %cst_110 : f32 to vector<32x32xf32>
      %228 = arith.subf %227, %217 : vector<32x32xf32>
      %229 = arith.mulf %228, %226 : vector<32x32xf32>
      %230 = arith.mulf %217, %174 : vector<32x32xf32>
      %231 = arith.addf %229, %230 : vector<32x32xf32>
      scf.yield %231 : vector<32x32xf32>
    }
    %c2_i32_9 = arith.constant 2 : i32
    %c0_10 = arith.constant 0 : index
    %c0_11 = arith.constant 0 : index
    %25 = vector.load %arg14[%c0_10, %c0_11] : memref<32x32xf32, #tpu.memory_space<vmem>>, vector<32x32xf32>
    tpu.vector_store %arg14[%c0_10, %c0_11], %24 {strides = array<i32>} : memref<32x32xf32, #tpu.memory_space<vmem>>, vector<32x32xf32>,
    return
  }
}

</mosaic_0001>

<llo_original>
// kernel: gnn_forward.1
$region0: #{gnn_forward.1}
  #allocation0 [shape = 'u32[]', space=smem, size = 0x4, offset = 0x4, fixed_abs, tag = 'smem constant byte address 0x4 - core index']
  #allocation1 [shape = 'u32[144,128]{1,0:T(1,128)}', space=vmem, size = 0x12000, scoped, tag = 'internal scratch']
  %s0 = inlined_call_operand.vmem [shape: s32[96,1], index: 0, kind: input, shape index: {}]
  %s1 = inlined_call_operand.vmem [shape: s32[96,1], index: 1, kind: input, shape index: {}]
  %s2 = inlined_call_operand.vmem [shape: s32[1,96], index: 2, kind: input, shape index: {}]
  %s3 = inlined_call_operand.vmem [shape: f32[32,32], index: 3, kind: input, shape index: {}]
  %s4 = inlined_call_operand.vmem [shape: bf16[96,8], index: 4, kind: input, shape index: {}]
  %s5 = inlined_call_operand.vmem [shape: bf16[2,32,64], index: 5, kind: input, shape index: {}]
  %s6 = inlined_call_operand.vmem [shape: bf16[2,8,64], index: 6, kind: input, shape index: {}]
  %s7 = inlined_call_operand.vmem [shape: f32[2,1,64], index: 7, kind: input, shape index: {}]
  %s8 = inlined_call_operand.vmem [shape: bf16[4,64,32], index: 8, kind: input, shape index: {}]
  %s9 = inlined_call_operand.vmem [shape: f32[4,1,32], index: 9, kind: input, shape index: {}]
  %s10 = inlined_call_operand.vmem [shape: bf16[6,32,32], index: 10, kind: input, shape index: {}]
  %s11 = inlined_call_operand.vmem [shape: bf16[6,32,32], index: 11, kind: input, shape index: {}]
  %s12 = inlined_call_operand.vmem [shape: f32[6,1,32], index: 12, kind: input, shape index: {}]
  %s13 = inlined_call_operand.vmem [shape: f32[6,1,32], index: 13, kind: input, shape index: {}]
  %s14 = inlined_call_operand.hbm [shape: f32[32,32], index: 14, kind: output, shape index: {}]
  %s15 = sld [smem:[#allocation0]]
  $region73: #{gnn_forward.1} parent=0
    _
  %s17 = ssub.s32 1, %s15
  %s18 = scalar_select 0, %s17, %s15
  $region1: #{gnn_forward.1} parent=0
    #allocation2 [shape = 'u8[16384]{0}', space=vmem, size = 0x4000, scoped, tag = 'output window, operand 0, single buffered']
    #allocation3 [shape = 's32[1]{0}', space=sflag, size = 0x4, scoped, tag = 'scoped memory for gnn_forward.1']
    %19 = vsyncpa [#allocation3], 0
    // Predicated region
    $region2: #{gnn_forward.1} parent=1 // pred_check
      _
    $region3: #{gnn_forward.1} parent=1 // pred_check_branch
      %21 = sbr.rel (0) target = $region5
    $region4: #{gnn_forward.1} parent=1 // pred_region
      _
    $region5: #{gnn_forward.1} parent=1 // pred_fallthru
      _
    // Predicated region
    $region6: #{gnn_forward.1} parent=1 // pred_check
      _
    $region7: #{gnn_forward.1} parent=1 // pred_check_branch
      %23 = sbr.rel (0) target = $region9
    $region8: #{gnn_forward.1} parent=1 // pred_region
      _
    $region9: #{gnn_forward.1} parent=1 // pred_fallthru
      _
    // Predicated region
    $region10: #{gnn_forward.1} parent=1 // pred_check
      _
    $region11: #{gnn_forward.1} parent=1 // pred_check_branch
      %25 = sbr.rel (0) target = $region13
    $region12: #{gnn_forward.1} parent=1 // pred_region
      _
    $region13: #{gnn_forward.1} parent=1 // pred_fallthru
      _
    // Predicated region
    $region14: #{gnn_forward.1} parent=1 // pred_check
      _
    $region15: #{gnn_forward.1} parent=1 // pred_check_branch
      %27 = sbr.rel (0) target = $region17
    $region16: #{gnn_forward.1} parent=1 // pred_region
      _
    $region17: #{gnn_forward.1} parent=1 // pred_fallthru
      _
    // Predicated region
    $region18: #{gnn_forward.1} parent=1 // pred_check
      _
    $region19: #{gnn_forward.1} parent=1 // pred_check_branch
      %29 = sbr.rel (0) target = $region21
    $region20: #{gnn_forward.1} parent=1 // pred_region
      _
    $region21: #{gnn_forward.1} parent=1 // pred_fallthru
      _
    // Predicated region
    $region22: #{gnn_forward.1} parent=1 // pred_check
      _
    $region23: #{gnn_forward.1} parent=1 // pred_check_branch
      %31 = sbr.rel (0) target = $region25
    $region24: #{gnn_forward.1} parent=1 // pred_region
      _
    $region25: #{gnn_forward.1} parent=1 // pred_fallthru
      _
    // Predicated region
    $region26: #{gnn_forward.1} parent=1 // pred_check
      _
    $region27: #{gnn_forward.1} parent=1 // pred_check_branch
      %33 = sbr.rel (0) target = $region29
    $region28: #{gnn_forward.1} parent=1 // pred_region
      _
    $region29: #{gnn_forward.1} parent=1 // pred_fallthru
      _
    // Predicated region
    $region30: #{gnn_forward.1} parent=1 // pred_check
      _
    $region31: #{gnn_forward.1} parent=1 // pred_check_branch
      %35 = sbr.rel (0) target = $region33
    $region32: #{gnn_forward.1} parent=1 // pred_region
      _
    $region33: #{gnn_forward.1} parent=1 // pred_fallthru
      _
    // Predicated region
    $region34: #{gnn_forward.1} parent=1 // pred_check
      _
    $region35: #{gnn_forward.1} parent=1 // pred_check_branch
      %37 = sbr.rel (0) target = $region37
    $region36: #{gnn_forward.1} parent=1 // pred_region
      _
    $region37: #{gnn_forward.1} parent=1 // pred_fallthru
      _
    // Predicated region
    $region38: #{gnn_forward.1} parent=1 // pred_check
      _
    $region39: #{gnn_forward.1} parent=1 // pred_check_branch
      %39 = sbr.rel (0) target = $region41
    $region40: #{gnn_forward.1} parent=1 // pred_region
      _
    $region41: #{gnn_forward.1} parent=1 // pred_fallthru
      _
    // Predicated region
    $region42: #{gnn_forward.1} parent=1 // pred_check
      _
    $region43: #{gnn_forward.1} parent=1 // pred_check_branch
      %41 = sbr.rel (0) target = $region45
    $region44: #{gnn_forward.1} parent=1 // pred_region
      _
    $region45: #{gnn_forward.1} parent=1 // pred_fallthru
      _
    // Predicated region
    $region46: #{gnn_forward.1} parent=1 // pred_check
      _
    $region47: #{gnn_forward.1} parent=1 // pred_check_branch
      %43 = sbr.rel (0) target = $region49
    $region48: #{gnn_forward.1} parent=1 // pred_region
      _
    $region49: #{gnn_forward.1} parent=1 // pred_fallthru
      _
    // Predicated region
    $region50: #{gnn_forward.1} parent=1 // pred_check
      _
    $region51: #{gnn_forward.1} parent=1 // pred_check_branch
      %45 = sbr.rel (0) target = $region53
    $region52: #{gnn_forward.1} parent=1 // pred_region
      _
    $region53: #{gnn_forward.1} parent=1 // pred_fallthru
      _
    // Predicated region
    $region54: #{gnn_forward.1} parent=1 // pred_check
      _
    $region55: #{gnn_forward.1} parent=1 // pred_check_branch
      %47 = sbr.rel (0) target = $region57
    $region56: #{gnn_forward.1} parent=1 // pred_region
      _
    $region57: #{gnn_forward.1} parent=1 // pred_fallthru
      _
    %v49 = vlaneseq
    %v50 = vand.u32 %v49, 127
    %v51 = vld [vmem:[%s0] sm:$0xff]
    %v52 = vld [vmem:[%s0 + $0x8] sm:$0xff]
    %v53 = vld [vmem:[%s0 + $0x10] sm:$0xff]
    %v54 = vld [vmem:[%s0 + $0x18] sm:$0xff]
    %v55 = vld [vmem:[%s0 + $0x20] sm:$0xff]
    %v56 = vld [vmem:[%s0 + $0x28] sm:$0xff]
    %v57 = vld [vmem:[%s0 + $0x30] sm:$0xff]
    %v58 = vld [vmem:[%s0 + $0x38] sm:$0xff]
    %v59 = vld [vmem:[%s0 + $0x40] sm:$0xff]
    %v60 = vld [vmem:[%s0 + $0x48] sm:$0xff]
    %v61 = vld [vmem:[%s0 + $0x50] sm:$0xff]
    %v62 = vld [vmem:[%s0 + $0x58] sm:$0xff]
    %63 = vset.pattern.permute.xlu0 0
    %64 = vperm.xlu0 %63, %v51
    %v65 = vpop.permute.xlu0 %64
    %66 = vset.pattern.permute.xlu0 0
    %67 = vperm.xlu0 %66, %v52
    %v68 = vpop.permute.xlu0 %67
    %69 = vset.pattern.permute.xlu0 0
    %70 = vperm.xlu0 %69, %v53
    %v71 = vpop.permute.xlu0 %70
    %72 = vset.pattern.permute.xlu0 0
    %73 = vperm.xlu0 %72, %v54
    %v74 = vpop.permute.xlu0 %73
    %75 = vset.pattern.permute.xlu0 0
    %76 = vperm.xlu0 %75, %v55
    %v77 = vpop.permute.xlu0 %76
    %78 = vset.pattern.permute.xlu0 0
    %79 = vperm.xlu0 %78, %v56
    %v80 = vpop.permute.xlu0 %79
    %81 = vset.pattern.permute.xlu0 0
    %82 = vperm.xlu0 %81, %v57
    %v83 = vpop.permute.xlu0 %82
    %84 = vset.pattern.permute.xlu0 0
    %85 = vperm.xlu0 %84, %v58
    %v86 = vpop.permute.xlu0 %85
    %87 = vset.pattern.permute.xlu0 0
    %88 = vperm.xlu0 %87, %v59
    %v89 = vpop.permute.xlu0 %88
    %90 = vset.pattern.permute.xlu0 0
    %91 = vperm.xlu0 %90, %v60
    %v92 = vpop.permute.xlu0 %91
    %93 = vset.pattern.permute.xlu0 0
    %94 = vperm.xlu0 %93, %v61
    %v95 = vpop.permute.xlu0 %94
    %96 = vset.pattern.permute.xlu0 0
    %97 = vperm.xlu0 %96, %v62
    %v98 = vpop.permute.xlu0 %97
    %vm99 = vcmp.eq.s32.totalorder %v50, %v65
    %vm100 = vcmp.eq.s32.totalorder %v50, %v68
    %vm101 = vcmp.eq.s32.totalorder %v50, %v71
    %vm102 = vcmp.eq.s32.totalorder %v50, %v74
    %vm103 = vcmp.eq.s32.totalorder %v50, %v77
    %vm104 = vcmp.eq.s32.totalorder %v50, %v80
    %vm105 = vcmp.eq.s32.totalorder %v50, %v83
    %vm106 = vcmp.eq.s32.totalorder %v50, %v86
    %vm107 = vcmp.eq.s32.totalorder %v50, %v89
    %vm108 = vcmp.eq.s32.totalorder %v50, %v92
    %vm109 = vcmp.eq.s32.totalorder %v50, %v95
    %vm110 = vcmp.eq.s32.totalorder %v50, %v98
    %v111 = vld [vmem:[%s1] sm:$0xff]
    %v112 = vld [vmem:[%s1 + $0x8] sm:$0xff]
    %v113 = vld [vmem:[%s1 + $0x10] sm:$0xff]
    %v114 = vld [vmem:[%s1 + $0x18] sm:$0xff]
    %v115 = vld [vmem:[%s1 + $0x20] sm:$0xff]
    %v116 = vld [vmem:[%s1 + $0x28] sm:$0xff]
    %v117 = vld [vmem:[%s1 + $0x30] sm:$0xff]
    %v118 = vld [vmem:[%s1 + $0x38] sm:$0xff]
    %v119 = vld [vmem:[%s1 + $0x40] sm:$0xff]
    %v120 = vld [vmem:[%s1 + $0x48] sm:$0xff]
    %v121 = vld [vmem:[%s1 + $0x50] sm:$0xff]
    %v122 = vld [vmem:[%s1 + $0x58] sm:$0xff]
    %123 = vset.pattern.permute.xlu0 0
    %124 = vperm.xlu0 %123, %v111
    %v125 = vpop.permute.xlu0 %124
    %126 = vset.pattern.permute.xlu0 0
    %127 = vperm.xlu0 %126, %v112
    %v128 = vpop.permute.xlu0 %127
    %129 = vset.pattern.permute.xlu0 0
    %130 = vperm.xlu0 %129, %v113
    %v131 = vpop.permute.xlu0 %130
    %132 = vset.pattern.permute.xlu0 0
    %133 = vperm.xlu0 %132, %v114
    %v134 = vpop.permute.xlu0 %133
    %135 = vset.pattern.permute.xlu0 0
    %136 = vperm.xlu0 %135, %v115
    %v137 = vpop.permute.xlu0 %136
    %138 = vset.pattern.permute.xlu0 0
    %139 = vperm.xlu0 %138, %v116
    %v140 = vpop.permute.xlu0 %139
    %141 = vset.pattern.permute.xlu0 0
    %142 = vperm.xlu0 %141, %v117
    %v143 = vpop.permute.xlu0 %142
    %144 = vset.pattern.permute.xlu0 0
    %145 = vperm.xlu0 %144, %v118
    %v146 = vpop.permute.xlu0 %145
    %147 = vset.pattern.permute.xlu0 0
    %148 = vperm.xlu0 %147, %v119
    %v149 = vpop.permute.xlu0 %148
    %150 = vset.pattern.permute.xlu0 0
    %151 = vperm.xlu0 %150, %v120
    %v152 = vpop.permute.xlu0 %151
    %153 = vset.pattern.permute.xlu0 0
    %154 = vperm.xlu0 %153, %v121
    %v155 = vpop.permute.xlu0 %154
    %156 = vset.pattern.permute.xlu0 0
    %157 = vperm.xlu0 %156, %v122
    %v158 = vpop.permute.xlu0 %157
    %vm159 = vcmp.eq.s32.totalorder %v50, %v125
    %vm160 = vcmp.eq.s32.totalorder %v50, %v128
    %vm161 = vcmp.eq.s32.totalorder %v50, %v131
    %vm162 = vcmp.eq.s32.totalorder %v50, %v134
    %vm163 = vcmp.eq.s32.totalorder %v50, %v137
    %vm164 = vcmp.eq.s32.totalorder %v50, %v140
    %vm165 = vcmp.eq.s32.totalorder %v50, %v143
    %vm166 = vcmp.eq.s32.totalorder %v50, %v146
    %vm167 = vcmp.eq.s32.totalorder %v50, %v149
    %vm168 = vcmp.eq.s32.totalorder %v50, %v152
    %vm169 = vcmp.eq.s32.totalorder %v50, %v155
    %vm170 = vcmp.eq.s32.totalorder %v50, %v158
    %v171 = vsel %vm99, 1, 0
    %v172 = vsel %vm100, 1, 0
    %v173 = vsel %vm101, 1, 0
    %v174 = vsel %vm102, 1, 0
    %v175 = vsel %vm103, 1, 0
    %v176 = vsel %vm104, 1, 0
    %v177 = vsel %vm105, 1, 0
    %v178 = vsel %vm106, 1, 0
    %v179 = vsel %vm107, 1, 0
    %v180 = vsel %vm108, 1, 0
    %v181 = vsel %vm109, 1, 0
    %v182 = vsel %vm110, 1, 0
    %v183 = vcvt.s32.f32 %v171
    %v184 = vcvt.s32.f32 %v172
    %v185 = vcvt.s32.f32 %v173
    %v186 = vcvt.s32.f32 %v174
    %v187 = vcvt.s32.f32 %v175
    %v188 = vcvt.s32.f32 %v176
    %v189 = vcvt.s32.f32 %v177
    %v190 = vcvt.s32.f32 %v178
    %v191 = vcvt.s32.f32 %v179
    %v192 = vcvt.s32.f32 %v180
    %v193 = vcvt.s32.f32 %v181
    %v194 = vcvt.s32.f32 %v182
    %v195 = vpack.c.bf16 %v184, %v183
    %v196 = vpack.c.bf16 %v186, %v185
    %v197 = vpack.c.bf16 %v188, %v187
    %v198 = vpack.c.bf16 %v190, %v189
    %v199 = vpack.c.bf16 %v192, %v191
    %v200 = vpack.c.bf16 %v194, %v193
    %v201 = vsel %vm159, 1, 0
    %v202 = vsel %vm160, 1, 0
    %v203 = vsel %vm161, 1, 0
    %v204 = vsel %vm162, 1, 0
    %v205 = vsel %vm163, 1, 0
    %v206 = vsel %vm164, 1, 0
    %v207 = vsel %vm165, 1, 0
    %v208 = vsel %vm166, 1, 0
    %v209 = vsel %vm167, 1, 0
    %v210 = vsel %vm168, 1, 0
    %v211 = vsel %vm169, 1, 0
    %v212 = vsel %vm170, 1, 0
    %v213 = vcvt.s32.f32 %v201
    %v214 = vcvt.s32.f32 %v202
    %v215 = vcvt.s32.f32 %v203
    %v216 = vcvt.s32.f32 %v204
    %v217 = vcvt.s32.f32 %v205
    %v218 = vcvt.s32.f32 %v206
    %v219 = vcvt.s32.f32 %v207
    %v220 = vcvt.s32.f32 %v208
    %v221 = vcvt.s32.f32 %v209
    %v222 = vcvt.s32.f32 %v210
    %v223 = vcvt.s32.f32 %v211
    %v224 = vcvt.s32.f32 %v212
    %v225 = vpack.c.bf16 %v214, %v213
    %v226 = vpack.c.bf16 %v216, %v215
    %v227 = vpack.c.bf16 %v218, %v217
    %v228 = vpack.c.bf16 %v220, %v219
    %v229 = vpack.c.bf16 %v222, %v221
    %v230 = vpack.c.bf16 %v224, %v223
    %v231 = vsub.bf16 %v195, %v225
    %v232 = vsub.bf16 %v196, %v226
    %v233 = vsub.bf16 %v197, %v227
    %v234 = vsub.bf16 %v198, %v228
    %v235 = vsub.bf16 %v199, %v229
    %v236 = vsub.bf16 %v200, %v230
    %v237 = vlaneseq
    %v238 = vshrl.u32 %v237, 7
    %v239 = vadd.s32 %v238, 8
    %v240 = vadd.s32 %v238, 16
    %v241 = vadd.s32 %v238, 24
    %v242 = vld [vmem:[%s2] sm:$0x1]
    %v243 = vlaneseq
    %v244 = vshrl.u32 %v243, 7
    %v245 = vsub.s32 0, %v244
    %v246 = vrot.slane %v242, %v245
    %vm247 = vcmp.eq.s32.totalorder %v238, %v246
    %vm248 = vcmp.eq.s32.totalorder %v239, %v246
    %vm249 = vcmp.eq.s32.totalorder %v240, %v246
    %vm250 = vcmp.eq.s32.totalorder %v241, %v246
    %v251 = vsel %vm247, 1, 0
    %v252 = vsel %vm248, 1, 0
    %v253 = vsel %vm249, 1, 0
    %v254 = vsel %vm250, 1, 0
    %v255 = vcvt.s32.f32 %v251
    %v256 = vcvt.s32.f32 %v252
    %v257 = vcvt.s32.f32 %v253
    %v258 = vcvt.s32.f32 %v254
    %v259 = vpack.c.bf16 %v256, %v255
    %v260 = vpack.c.bf16 %v258, %v257
    %v261 = vld [vmem:[%s4] sm:$0xf]
    %v262 = vld [vmem:[%s4 + $0x4] sm:$0xf]
    %v263 = vld [vmem:[%s4 + $0x8] sm:$0xf]
    %v264 = vld [vmem:[%s4 + $0xc] sm:$0xf]
    %v265 = vld [vmem:[%s4 + $0x10] sm:$0xf]
    %v266 = vld [vmem:[%s4 + $0x14] sm:$0xf]
    %v267 = vld [vmem:[%s4 + $0x18] sm:$0xf]
    %v268 = vld [vmem:[%s4 + $0x1c] sm:$0xf]
    %v269 = vld [vmem:[%s4 + $0x20] sm:$0xf]
    %v270 = vld [vmem:[%s4 + $0x24] sm:$0xf]
    %v271 = vld [vmem:[%s4 + $0x28] sm:$0xf]
    %v272 = vld [vmem:[%s4 + $0x2c] sm:$0xf]
    %v273 = vld [vmem:[%s3] sm:$0xff]
    %v274 = vld [vmem:[%s3 + $0x8] sm:$0xff]
    %v275 = vld [vmem:[%s3 + $0x10] sm:$0xff]
    %v276 = vld [vmem:[%s3 + $0x18] sm:$0xff]
    loop: start=0, step=1, limit=2
    $region58: #{gnn_forward.1} parent=1 // loop_pre_header
      _
    $region59: #{gnn_forward.1} parent=1 // loop_header
      %s278 = sphi 0, %s282
      %p279 = scmp.ge.s32.totalorder %s278, 2
      %v283 = vphi %v273, %v2452
      %v284 = vphi %v274, %v2453
      %v285 = vphi %v275, %v2454
      %v286 = vphi %v276, %v2455
    $region60: #{gnn_forward.1} parent=1 // loop_header_branch
      %281 = sbr.rel (%p279) target = $region64
    $region61: #{gnn_forward.1} parent=1 // loop_body
      %p287 = scmp.gt.s32.totalorder %s278, 0
      %v288 = vmax.f32 %v283, 0.0
      %v289 = vmax.f32 %v284, 0.0
      %v290 = vmax.f32 %v285, 0.0
      %v291 = vmax.f32 %v286, 0.0
      %s292 = scalar_select %p287, 1, 0
      %v293 = vstv %s292
      %vm294 = vcmp.eq.s32.totalorder %v293, 1
      %v295 = vsel %vm294, %v288, %v283
      %v296 = vsel %vm294, %v289, %v284
      %v297 = vsel %vm294, %v290, %v285
      %v298 = vsel %vm294, %v291, %v286
      %s299 = smul.u32 %s278, 4
      %s300 = smul.addr %s299, 4
      %s301 = scalar_lea.vmem %s5, %s300
      %v302 = vld [vmem:[%s301] sm:$0xf]
      %v303 = vld [vmem:[%s301 + $0x4] sm:$0xf]
      %v304 = vld [vmem:[%s301 + $0x8] sm:$0xf]
      %v305 = vld [vmem:[%s301 + $0xc] sm:$0xf]
      %s306 = smul.addr %s278, 4
      %s307 = scalar_lea.vmem %s6, %s306
      %v308 = vld [vmem:[%s307] sm:$0xf]
      %s309 = scalar_lea.vmem %s7, %s278
      %v310 = vld [vmem:[%s309] sm:$0x1]
      %s311 = smul.u32 %s278, 2
      %s312 = smul.u32 %s311, 8
      %s313 = smul.addr %s312, 4
      %s314 = scalar_lea.vmem %s8, %s313
      %v315 = vld [vmem:[%s314] sm:$0xf]
      %v316 = vld [vmem:[%s314 + $0x4] sm:$0xf]
      %v317 = vld [vmem:[%s314 + $0x8] sm:$0xf]
      %v318 = vld [vmem:[%s314 + $0xc] sm:$0xf]
      %v319 = vld [vmem:[%s314 + $0x10] sm:$0xf]
      %v320 = vld [vmem:[%s314 + $0x14] sm:$0xf]
      %v321 = vld [vmem:[%s314 + $0x18] sm:$0xf]
      %v322 = vld [vmem:[%s314 + $0x1c] sm:$0xf]
      %s323 = sadd.s32 %s311, 1
      %s324 = smul.u32 %s323, 8
      %s325 = smul.addr %s324, 4
      %s326 = scalar_lea.vmem %s8, %s325
      %v327 = vld [vmem:[%s326] sm:$0xf]
      %v328 = vld [vmem:[%s326 + $0x4] sm:$0xf]
      %v329 = vld [vmem:[%s326 + $0x8] sm:$0xf]
      %v330 = vld [vmem:[%s326 + $0xc] sm:$0xf]
      %v331 = vld [vmem:[%s326 + $0x10] sm:$0xf]
      %v332 = vld [vmem:[%s326 + $0x14] sm:$0xf]
      %v333 = vld [vmem:[%s326 + $0x18] sm:$0xf]
      %v334 = vld [vmem:[%s326 + $0x1c] sm:$0xf]
      %s335 = scalar_lea.vmem %s9, %s311
      %v336 = vld [vmem:[%s335] sm:$0x1]
      %s337 = scalar_lea.vmem %s9, %s323
      %v338 = vld [vmem:[%s337] sm:$0x1]
      %s339 = smul.u32 %s278, 3
      %s340 = smul.u32 %s339, 4
      %s341 = smul.addr %s340, 4
      %s342 = scalar_lea.vmem %s10, %s341
      %v343 = vld [vmem:[%s342] sm:$0xf]
      %v344 = vld [vmem:[%s342 + $0x4] sm:$0xf]
      %v345 = vld [vmem:[%s342 + $0x8] sm:$0xf]
      %v346 = vld [vmem:[%s342 + $0xc] sm:$0xf]
      %s347 = sadd.s32 %s339, 1
      %s348 = smul.u32 %s347, 4
      %s349 = smul.addr %s348, 4
      %s350 = scalar_lea.vmem %s10, %s349
      %v351 = vld [vmem:[%s350] sm:$0xf]
      %v352 = vld [vmem:[%s350 + $0x4] sm:$0xf]
      %v353 = vld [vmem:[%s350 + $0x8] sm:$0xf]
      %v354 = vld [vmem:[%s350 + $0xc] sm:$0xf]
      %s355 = sadd.s32 %s339, 2
      %s356 = smul.u32 %s355, 4
      %s357 = smul.addr %s356, 4
      %s358 = scalar_lea.vmem %s10, %s357
      %v359 = vld [vmem:[%s358] sm:$0xf]
      %v360 = vld [vmem:[%s358 + $0x4] sm:$0xf]
      %v361 = vld [vmem:[%s358 + $0x8] sm:$0xf]
      %v362 = vld [vmem:[%s358 + $0xc] sm:$0xf]
      %s363 = smul.addr %s340, 4
      %s364 = scalar_lea.vmem %s11, %s363
      %v365 = vld [vmem:[%s364] sm:$0xf]
      %v366 = vld [vmem:[%s364 + $0x4] sm:$0xf]
      %v367 = vld [vmem:[%s364 + $0x8] sm:$0xf]
      %v368 = vld [vmem:[%s364 + $0xc] sm:$0xf]
      %s369 = smul.addr %s348, 4
      %s370 = scalar_lea.vmem %s11, %s369
      %v371 = vld [vmem:[%s370] sm:$0xf]
      %v372 = vld [vmem:[%s370 + $0x4] sm:$0xf]
      %v373 = vld [vmem:[%s370 + $0x8] sm:$0xf]
      %v374 = vld [vmem:[%s370 + $0xc] sm:$0xf]
      %s375 = smul.addr %s356, 4
      %s376 = scalar_lea.vmem %s11, %s375
      %v377 = vld [vmem:[%s376] sm:$0xf]
      %v378 = vld [vmem:[%s376 + $0x4] sm:$0xf]
      %v379 = vld [vmem:[%s376 + $0x8] sm:$0xf]
      %v380 = vld [vmem:[%s376 + $0xc] sm:$0xf]
      %s381 = scalar_lea.vmem %s12, %s339
      %v382 = vld [vmem:[%s381] sm:$0x1]
      %s383 = scalar_lea.vmem %s13, %s339
      %v384 = vld [vmem:[%s383] sm:$0x1]
      %v385 = vadd.f32 %v382, %v384
      %s386 = scalar_lea.vmem %s12, %s347
      %v387 = vld [vmem:[%s386] sm:$0x1]
      %s388 = scalar_lea.vmem %s13, %s347
      %v389 = vld [vmem:[%s388] sm:$0x1]
      %v390 = vadd.f32 %v387, %v389
      %s391 = scalar_lea.vmem %s12, %s355
      %v392 = vld [vmem:[%s391] sm:$0x1]
      %s393 = scalar_lea.vmem %s13, %s355
      %v394 = vld [vmem:[%s393] sm:$0x1]
      %v396 = vlaneseq
      %v397 = vshrl.u32 %v396, 7
      %v398 = vsub.s32 0, %v397
      %v399 = vrot.slane %v310, %v398
      %v413 = vunpack.c.l.b16 %v261
      %v414 = vunpack.c.l.b16 %v262
      %v415 = vunpack.c.l.b16 %v263
      %v416 = vunpack.c.l.b16 %v264
      %v417 = vunpack.c.l.b16 %v265
      %v418 = vunpack.c.l.b16 %v266
      %v419 = vunpack.c.l.b16 %v267
      %v420 = vunpack.c.l.b16 %v268
      %v421 = vunpack.c.l.b16 %v269
      %v422 = vunpack.c.l.b16 %v270
      %v423 = vunpack.c.l.b16 %v271
      %v424 = vunpack.c.l.b16 %v272
      %v425 = vpack.c.b16 %v414, %v413
      %v426 = vpack.c.b16 %v416, %v415
      %v427 = vpack.c.b16 %v418, %v417
      %v428 = vpack.c.b16 %v420, %v419
      %v429 = vpack.c.b16 %v422, %v421
      %v430 = vpack.c.b16 %v424, %v423
      %vm431 = vcmask 64512
      %v433 = vsel %vm431, %v425, 0
      %v436 = vsel %vm431, %v426, 0
      %v439 = vsel %vm431, %v427, 0
      %v442 = vsel %vm431, %v428, 0
      %v445 = vsel %vm431, %v429, 0
      %v448 = vsel %vm431, %v430, 0
      %vm450 = vcmask 1043456
      %v452 = vsel %vm450, %v308, 0
      %454 = vmatprep.subr.bf16.mxu0 0
      %455 = vmatpush1.bf16.msra.mxu0 0
      %456 = vmatprep.subr.bf16.mxu0 0
      %457 = vmatpush1.bf16.msra.mxu0 0
      %458 = vmatprep.subr.bf16.mxu0 0
      %459 = vmatpush1.bf16.msra.mxu0 0
      %460 = vmatprep.subr.bf16.mxu0 0
      %461 = vmatpush1.bf16.msra.mxu0 0
      %462 = vmatprep.subr.bf16.mxu0 0
      %463 = vmatpush1.bf16.msra.mxu0 0
      %464 = vmatprep.subr.bf16.mxu0 0
      %465 = vmatpush1.bf16.msra.mxu0 0
      %466 = vmatprep.subr.bf16.mxu0 0
      %467 = vmatpush1.bf16.msra.mxu0 0
      %468 = vmatprep.subr.bf16.mxu0 0
      %469 = vmatpush1.bf16.msra.mxu0 %v452
      %470 = vmatprep.subr.bf16.mxu0 0
      %471 = vmatpush2.bf16.msra.mxu0 0
      %472 = vmatprep.subr.bf16.mxu0 0
      %473 = vmatpush2.bf16.msra.mxu0 0
      %474 = vmatprep.subr.bf16.mxu0 0
      %475 = vmatpush2.bf16.msra.mxu0 0
      %476 = vmatprep.subr.bf16.mxu0 0
      %477 = vmatpush2.bf16.msra.mxu0 0
      %478 = vmatprep.subr.bf16.mxu0 0
      %479 = vmatpush2.bf16.msra.mxu0 0
      %480 = vmatprep.subr.bf16.mxu0 0
      %481 = vmatpush2.bf16.msra.mxu0 0
      %482 = vmatprep.subr.bf16.mxu0 0
      %483 = vmatpush2.bf16.msra.mxu0 0
      %484 = vmatprep.subr.bf16.mxu0 0
      %485 = vmatpush2.bf16.msra.mxu0 0
      %486 = vmatprep.mubr.bf16.mxu0 0
      %487 = vmatmul.mubr.bf16.gmra.mxu0 %v433
      %v488 = vpop.f32.mrf.mxu0
      %v489 = vadd.f32 %v399, %v488
      %v490 = vpop.f32.mrf.mxu0
      %v491 = vpop.f32.mrf.mxu0
      %v492 = vadd.f32 %v399, %v491
      %v493 = vpop.f32.mrf.mxu0
      %494 = vmatprep.mubr.bf16.mxu0 0
      %495 = vmatmul.mubr.bf16.gmra.mxu0 %v436
      %v496 = vpop.f32.mrf.mxu0
      %v497 = vadd.f32 %v399, %v496
      %v498 = vpop.f32.mrf.mxu0
      %v499 = vpop.f32.mrf.mxu0
      %v500 = vadd.f32 %v399, %v499
      %v501 = vpop.f32.mrf.mxu0
      %502 = vmatprep.mubr.bf16.mxu0 0
      %503 = vmatmul.mubr.bf16.gmra.mxu0 %v439
      %v504 = vpop.f32.mrf.mxu0
      %v505 = vadd.f32 %v399, %v504
      %v506 = vpop.f32.mrf.mxu0
      %v507 = vpop.f32.mrf.mxu0
      %v508 = vadd.f32 %v399, %v507
      %v509 = vpop.f32.mrf.mxu0
      %510 = vmatprep.mubr.bf16.mxu0 0
      %511 = vmatmul.mubr.bf16.gmra.mxu0 %v442
      %v512 = vpop.f32.mrf.mxu0
      %v513 = vadd.f32 %v399, %v512
      %v514 = vpop.f32.mrf.mxu0
      %v515 = vpop.f32.mrf.mxu0
      %v516 = vadd.f32 %v399, %v515
      %v517 = vpop.f32.mrf.mxu0
      %518 = vmatprep.mubr.bf16.mxu0 0
      %519 = vmatmul.mubr.bf16.gmra.mxu0 %v445
      %v520 = vpop.f32.mrf.mxu0
      %v521 = vadd.f32 %v399, %v520
      %v522 = vpop.f32.mrf.mxu0
      %v523 = vpop.f32.mrf.mxu0
      %v524 = vadd.f32 %v399, %v523
      %v525 = vpop.f32.mrf.mxu0
      %526 = vmatprep.mubr.bf16.mxu0 0
      %527 = vmatmul.mubr.bf16.gmra.mxu0 %v448
      %v528 = vpop.f32.mrf.mxu0
      %v529 = vadd.f32 %v399, %v528
      %v530 = vpop.f32.mrf.mxu0
      %v531 = vpop.f32.mrf.mxu0
      %v532 = vadd.f32 %v399, %v531
      %v533 = vpop.f32.mrf.mxu0
      %534 = vdwg.mxu0
      %v535 = vpack.c.bf16 %v296, %v295
      %v536 = vpack.c.bf16 %v298, %v297
      %v541 = vunpack.c.l.b16 %v302
      %v542 = vunpack.c.l.b16 %v303
      %v543 = vunpack.c.l.b16 %v304
      %v544 = vunpack.c.l.b16 %v305
      %v545 = vpack.c.b16 %v542, %v541
      %v546 = vpack.c.b16 %v544, %v543
      %vm549 = vcmask 261120
      %v551 = vsel %vm549, %v535, 0
      %v554 = vsel %vm549, %v536, 0
      %556 = vmatprep.subr.bf16.mxu0 0
      %557 = vmatpush1.bf16.msra.mxu0 0
      %558 = vmatprep.subr.bf16.mxu0 0
      %559 = vmatpush1.bf16.msra.mxu0 0
      %560 = vmatprep.subr.bf16.mxu0 0
      %561 = vmatpush1.bf16.msra.mxu0 0
      %562 = vmatprep.subr.bf16.mxu0 0
      %563 = vmatpush1.bf16.msra.mxu0 0
      %564 = vmatprep.subr.bf16.mxu0 0
      %565 = vmatpush1.bf16.msra.mxu0 0
      %566 = vmatprep.subr.bf16.mxu0 0
      %567 = vmatpush1.bf16.msra.mxu0 0
      %568 = vmatprep.subr.bf16.mxu0 0
      %569 = vmatpush1.bf16.msra.mxu0 %v546
      %570 = vmatprep.subr.bf16.mxu0 0
      %571 = vmatpush1.bf16.msra.mxu0 %v545
      %572 = vmatprep.subr.bf16.mxu0 0
      %573 = vmatpush2.bf16.msra.mxu0 0
      %574 = vmatprep.subr.bf16.mxu0 0
      %575 = vmatpush2.bf16.msra.mxu0 0
      %576 = vmatprep.subr.bf16.mxu0 0
      %577 = vmatpush2.bf16.msra.mxu0 0
      %578 = vmatprep.subr.bf16.mxu0 0
      %579 = vmatpush2.bf16.msra.mxu0 0
      %580 = vmatprep.subr.bf16.mxu0 0
      %581 = vmatpush2.bf16.msra.mxu0 0
      %582 = vmatprep.subr.bf16.mxu0 0
      %583 = vmatpush2.bf16.msra.mxu0 0
      %584 = vmatprep.subr.bf16.mxu0 0
      %585 = vmatpush2.bf16.msra.mxu0 0
      %586 = vmatprep.subr.bf16.mxu0 0
      %587 = vmatpush2.bf16.msra.mxu0 0
      %588 = vmatprep.mubr.bf16.mxu0 0
      %589 = vmatmul.mubr.bf16.gmra.mxu0 %v551
      %v590 = vpop.f32.mrf.mxu0
      %v591 = vadd.f32 0.0, %v590
      %v592 = vpop.f32.mrf.mxu0
      %v593 = vpop.f32.mrf.mxu0
      %v594 = vadd.f32 0.0, %v593
      %v595 = vpop.f32.mrf.mxu0
      %596 = vmatprep.mubr.bf16.mxu0 0
      %597 = vmatmul.mubr.bf16.gmra.mxu0 %v554
      %v598 = vpop.f32.mrf.mxu0
      %v599 = vadd.f32 0.0, %v598
      %v600 = vpop.f32.mrf.mxu0
      %v601 = vpop.f32.mrf.mxu0
      %v602 = vadd.f32 0.0, %v601
      %v603 = vpop.f32.mrf.mxu0
      %604 = vdwg.mxu0
      %v605 = vpack.c.bf16 %v594, %v591
      %v606 = vpack.c.bf16 %v602, %v599
      %v608 = vsel %vm549, %v231, 0
      %v611 = vsel %vm549, %v232, 0
      %v614 = vsel %vm549, %v233, 0
      %v617 = vsel %vm549, %v234, 0
      %v620 = vsel %vm549, %v235, 0
      %v623 = vsel %vm549, %v236, 0
      %625 = vmatprep.subr.bf16.mxu0 0
      %626 = vmatpush1.bf16.msra.mxu0 0
      %627 = vmatprep.subr.bf16.mxu0 0
      %628 = vmatpush1.bf16.msra.mxu0 0
      %629 = vmatprep.subr.bf16.mxu0 0
      %630 = vmatpush1.bf16.msra.mxu0 0
      %631 = vmatprep.subr.bf16.mxu0 0
      %632 = vmatpush1.bf16.msra.mxu0 0
      %633 = vmatprep.subr.bf16.mxu0 0
      %634 = vmatpush1.bf16.msra.mxu0 0
      %635 = vmatprep.subr.bf16.mxu0 0
      %636 = vmatpush1.bf16.msra.mxu0 0
      %637 = vmatprep.subr.bf16.mxu0 0
      %638 = vmatpush1.bf16.msra.mxu0 %v606
      %639 = vmatprep.subr.bf16.mxu0 0
      %640 = vmatpush1.bf16.msra.mxu0 %v605
      %641 = vmatprep.subr.bf16.mxu0 0
      %642 = vmatpush2.bf16.msra.mxu0 0
      %643 = vmatprep.subr.bf16.mxu0 0
      %644 = vmatpush2.bf16.msra.mxu0 0
      %645 = vmatprep.subr.bf16.mxu0 0
      %646 = vmatpush2.bf16.msra.mxu0 0
      %647 = vmatprep.subr.bf16.mxu0 0
      %648 = vmatpush2.bf16.msra.mxu0 0
      %649 = vmatprep.subr.bf16.mxu0 0
      %650 = vmatpush2.bf16.msra.mxu0 0
      %651 = vmatprep.subr.bf16.mxu0 0
      %652 = vmatpush2.bf16.msra.mxu0 0
      %653 = vmatprep.subr.bf16.mxu0 0
      %654 = vmatpush2.bf16.msra.mxu0 0
      %655 = vmatprep.subr.bf16.mxu0 0
      %656 = vmatpush2.bf16.msra.mxu0 0
      %657 = vmatprep.mubr.bf16.mxu0 0
      %658 = vmatmul.mubr.bf16.gmra.mxu0 %v608
      %v659 = vpop.f32.mrf.mxu0
      %v660 = vadd.f32 %v489, %v659
      %v661 = vpop.f32.mrf.mxu0
      %v662 = vpop.f32.mrf.mxu0
      %v663 = vadd.f32 %v492, %v662
      %v664 = vpop.f32.mrf.mxu0
      %665 = vmatprep.mubr.bf16.mxu0 0
      %666 = vmatmul.mubr.bf16.gmra.mxu0 %v611
      %v667 = vpop.f32.mrf.mxu0
      %v668 = vadd.f32 %v497, %v667
      %v669 = vpop.f32.mrf.mxu0
      %v670 = vpop.f32.mrf.mxu0
      %v671 = vadd.f32 %v500, %v670
      %v672 = vpop.f32.mrf.mxu0
      %673 = vmatprep.mubr.bf16.mxu0 0
      %674 = vmatmul.mubr.bf16.gmra.mxu0 %v614
      %v675 = vpop.f32.mrf.mxu0
      %v676 = vadd.f32 %v505, %v675
      %v677 = vpop.f32.mrf.mxu0
      %v678 = vpop.f32.mrf.mxu0
      %v679 = vadd.f32 %v508, %v678
      %v680 = vpop.f32.mrf.mxu0
      %681 = vmatprep.mubr.bf16.mxu0 0
      %682 = vmatmul.mubr.bf16.gmra.mxu0 %v617
      %v683 = vpop.f32.mrf.mxu0
      %v684 = vadd.f32 %v513, %v683
      %v685 = vpop.f32.mrf.mxu0
      %v686 = vpop.f32.mrf.mxu0
      %v687 = vadd.f32 %v516, %v686
      %v688 = vpop.f32.mrf.mxu0
      %689 = vmatprep.mubr.bf16.mxu0 0
      %690 = vmatmul.mubr.bf16.gmra.mxu0 %v620
      %v691 = vpop.f32.mrf.mxu0
      %v692 = vadd.f32 %v521, %v691
      %v693 = vpop.f32.mrf.mxu0
      %v694 = vpop.f32.mrf.mxu0
      %v695 = vadd.f32 %v524, %v694
      %v696 = vpop.f32.mrf.mxu0
      %697 = vmatprep.mubr.bf16.mxu0 0
      %698 = vmatmul.mubr.bf16.gmra.mxu0 %v623
      %v699 = vpop.f32.mrf.mxu0
      %v700 = vadd.f32 %v529, %v699
      %v701 = vpop.f32.mrf.mxu0
      %v702 = vpop.f32.mrf.mxu0
      %v703 = vadd.f32 %v532, %v702
      %v704 = vpop.f32.mrf.mxu0
      %705 = vdwg.mxu0
      %v706 = vmax.f32 %v660, 0.0
      %v707 = vmax.f32 %v663, 0.0
      %v708 = vmax.f32 %v668, 0.0
      %v709 = vmax.f32 %v671, 0.0
      %v710 = vmax.f32 %v676, 0.0
      %v711 = vmax.f32 %v679, 0.0
      %v712 = vmax.f32 %v684, 0.0
      %v713 = vmax.f32 %v687, 0.0
      %v714 = vmax.f32 %v692, 0.0
      %v715 = vmax.f32 %v695, 0.0
      %v716 = vmax.f32 %v700, 0.0
      %v717 = vmax.f32 %v703, 0.0
      %v718 = vpack.c.bf16 %v707, %v706
      %v719 = vpack.c.bf16 %v709, %v708
      %v720 = vpack.c.bf16 %v711, %v710
      %v721 = vpack.c.bf16 %v713, %v712
      %v722 = vpack.c.bf16 %v715, %v714
      %v723 = vpack.c.bf16 %v717, %v716
      %v725 = vlaneseq
      %v726 = vshrl.u32 %v725, 7
      %v727 = vsub.s32 0, %v726
      %v728 = vrot.slane %v336, %v727
      %v738 = vunpack.c.l.b16 %v315
      %v739 = vunpack.c.l.b16 %v316
      %v740 = vunpack.c.l.b16 %v317
      %v741 = vunpack.c.l.b16 %v318
      %v742 = vunpack.c.l.b16 %v319
      %v743 = vunpack.c.l.b16 %v320
      %v744 = vunpack.c.l.b16 %v321
      %v745 = vunpack.c.l.b16 %v322
      %v746 = vpack.c.b16 %v739, %v738
      %v747 = vpack.c.b16 %v741, %v740
      %v748 = vpack.c.b16 %v743, %v742
      %v749 = vpack.c.b16 %v745, %v744
      %vm754 = vcmask 523264
      %v756 = vsel %vm754, %v718, 0
      %v759 = vsel %vm754, %v719, 0
      %v762 = vsel %vm754, %v720, 0
      %v765 = vsel %vm754, %v721, 0
      %v768 = vsel %vm754, %v722, 0
      %v771 = vsel %vm754, %v723, 0
      %773 = vmatprep.subr.bf16.mxu0 0
      %774 = vmatpush1.bf16.msra.mxu0 0
      %775 = vmatprep.subr.bf16.mxu0 0
      %776 = vmatpush1.bf16.msra.mxu0 0
      %777 = vmatprep.subr.bf16.mxu0 0
      %778 = vmatpush1.bf16.msra.mxu0 0
      %779 = vmatprep.subr.bf16.mxu0 0
      %780 = vmatpush1.bf16.msra.mxu0 0
      %781 = vmatprep.subr.bf16.mxu0 0
      %782 = vmatpush1.bf16.msra.mxu0 %v749
      %783 = vmatprep.subr.bf16.mxu0 0
      %784 = vmatpush1.bf16.msra.mxu0 %v748
      %785 = vmatprep.subr.bf16.mxu0 0
      %786 = vmatpush1.bf16.msra.mxu0 %v747
      %787 = vmatprep.subr.bf16.mxu0 0
      %788 = vmatpush1.bf16.msra.mxu0 %v746
      %789 = vmatprep.subr.bf16.mxu0 0
      %790 = vmatpush2.bf16.msra.mxu0 0
      %791 = vmatprep.subr.bf16.mxu0 0
      %792 = vmatpush2.bf16.msra.mxu0 0
      %793 = vmatprep.subr.bf16.mxu0 0
      %794 = vmatpush2.bf16.msra.mxu0 0
      %795 = vmatprep.subr.bf16.mxu0 0
      %796 = vmatpush2.bf16.msra.mxu0 0
      %797 = vmatprep.subr.bf16.mxu0 0
      %798 = vmatpush2.bf16.msra.mxu0 0
      %799 = vmatprep.subr.bf16.mxu0 0
      %800 = vmatpush2.bf16.msra.mxu0 0
      %801 = vmatprep.subr.bf16.mxu0 0
      %802 = vmatpush2.bf16.msra.mxu0 0
      %803 = vmatprep.subr.bf16.mxu0 0
      %804 = vmatpush2.bf16.msra.mxu0 0
      %805 = vmatprep.mubr.bf16.mxu0 0
      %806 = vmatmul.mubr.bf16.gmra.mxu0 %v756
      %v807 = vpop.f32.mrf.mxu0
      %v808 = vadd.f32 %v728, %v807
      %v809 = vpop.f32.mrf.mxu0
      %v810 = vpop.f32.mrf.mxu0
      %v811 = vadd.f32 %v728, %v810
      %v812 = vpop.f32.mrf.mxu0
      %813 = vmatprep.mubr.bf16.mxu0 0
      %814 = vmatmul.mubr.bf16.gmra.mxu0 %v759
      %v815 = vpop.f32.mrf.mxu0
      %v816 = vadd.f32 %v728, %v815
      %v817 = vpop.f32.mrf.mxu0
      %v818 = vpop.f32.mrf.mxu0
      %v819 = vadd.f32 %v728, %v818
      %v820 = vpop.f32.mrf.mxu0
      %821 = vmatprep.mubr.bf16.mxu0 0
      %822 = vmatmul.mubr.bf16.gmra.mxu0 %v762
      %v823 = vpop.f32.mrf.mxu0
      %v824 = vadd.f32 %v728, %v823
      %v825 = vpop.f32.mrf.mxu0
      %v826 = vpop.f32.mrf.mxu0
      %v827 = vadd.f32 %v728, %v826
      %v828 = vpop.f32.mrf.mxu0
      %829 = vmatprep.mubr.bf16.mxu0 0
      %830 = vmatmul.mubr.bf16.gmra.mxu0 %v765
      %v831 = vpop.f32.mrf.mxu0
      %v832 = vadd.f32 %v728, %v831
      %v833 = vpop.f32.mrf.mxu0
      %v834 = vpop.f32.mrf.mxu0
      %v835 = vadd.f32 %v728, %v834
      %v836 = vpop.f32.mrf.mxu0
      %837 = vmatprep.mubr.bf16.mxu0 0
      %838 = vmatmul.mubr.bf16.gmra.mxu0 %v768
      %v839 = vpop.f32.mrf.mxu0
      %v840 = vadd.f32 %v728, %v839
      %v841 = vpop.f32.mrf.mxu0
      %v842 = vpop.f32.mrf.mxu0
      %v843 = vadd.f32 %v728, %v842
      %v844 = vpop.f32.mrf.mxu0
      %845 = vmatprep.mubr.bf16.mxu0 0
      %846 = vmatmul.mubr.bf16.gmra.mxu0 %v771
      %v847 = vpop.f32.mrf.mxu0
      %v848 = vadd.f32 %v728, %v847
      %v849 = vpop.f32.mrf.mxu0
      %v850 = vpop.f32.mrf.mxu0
      %v851 = vadd.f32 %v728, %v850
      %v852 = vpop.f32.mrf.mxu0
      %853 = vdwg.mxu0
      %v855 = vlaneseq
      %v856 = vshrl.u32 %v855, 7
      %v857 = vsub.s32 0, %v856
      %v858 = vrot.slane %v338, %v857
      %v868 = vunpack.c.l.b16 %v327
      %v869 = vunpack.c.l.b16 %v328
      %v870 = vunpack.c.l.b16 %v329
      %v871 = vunpack.c.l.b16 %v330
      %v872 = vunpack.c.l.b16 %v331
      %v873 = vunpack.c.l.b16 %v332
      %v874 = vunpack.c.l.b16 %v333
      %v875 = vunpack.c.l.b16 %v334
      %v876 = vpack.c.b16 %v869, %v868
      %v877 = vpack.c.b16 %v871, %v870
      %v878 = vpack.c.b16 %v873, %v872
      %v879 = vpack.c.b16 %v875, %v874
      %884 = vmatprep.subr.bf16.mxu0 0
      %885 = vmatpush1.bf16.msra.mxu0 0
      %886 = vmatprep.subr.bf16.mxu0 0
      %887 = vmatpush1.bf16.msra.mxu0 0
      %888 = vmatprep.subr.bf16.mxu0 0
      %889 = vmatpush1.bf16.msra.mxu0 0
      %890 = vmatprep.subr.bf16.mxu0 0
      %891 = vmatpush1.bf16.msra.mxu0 0
      %892 = vmatprep.subr.bf16.mxu0 0
      %893 = vmatpush1.bf16.msra.mxu0 %v879
      %894 = vmatprep.subr.bf16.mxu0 0
      %895 = vmatpush1.bf16.msra.mxu0 %v878
      %896 = vmatprep.subr.bf16.mxu0 0
      %897 = vmatpush1.bf16.msra.mxu0 %v877
      %898 = vmatprep.subr.bf16.mxu0 0
      %899 = vmatpush1.bf16.msra.mxu0 %v876
      %900 = vmatprep.subr.bf16.mxu0 0
      %901 = vmatpush2.bf16.msra.mxu0 0
      %902 = vmatprep.subr.bf16.mxu0 0
      %903 = vmatpush2.bf16.msra.mxu0 0
      %904 = vmatprep.subr.bf16.mxu0 0
      %905 = vmatpush2.bf16.msra.mxu0 0
      %906 = vmatprep.subr.bf16.mxu0 0
      %907 = vmatpush2.bf16.msra.mxu0 0
      %908 = vmatprep.subr.bf16.mxu0 0
      %909 = vmatpush2.bf16.msra.mxu0 0
      %910 = vmatprep.subr.bf16.mxu0 0
      %911 = vmatpush2.bf16.msra.mxu0 0
      %912 = vmatprep.subr.bf16.mxu0 0
      %913 = vmatpush2.bf16.msra.mxu0 0
      %914 = vmatprep.subr.bf16.mxu0 0
      %915 = vmatpush2.bf16.msra.mxu0 0
      %916 = vmatprep.mubr.bf16.mxu0 0
      %917 = vmatmul.mubr.bf16.gmra.mxu0 %v756
      %v918 = vpop.f32.mrf.mxu0
      %v919 = vadd.f32 %v858, %v918
      %v920 = vpop.f32.mrf.mxu0
      %v921 = vpop.f32.mrf.mxu0
      %v922 = vadd.f32 %v858, %v921
      %v923 = vpop.f32.mrf.mxu0
      %924 = vmatprep.mubr.bf16.mxu0 0
      %925 = vmatmul.mubr.bf16.gmra.mxu0 %v759
      %v926 = vpop.f32.mrf.mxu0
      %v927 = vadd.f32 %v858, %v926
      %v928 = vpop.f32.mrf.mxu0
      %v929 = vpop.f32.mrf.mxu0
      %v930 = vadd.f32 %v858, %v929
      %v931 = vpop.f32.mrf.mxu0
      %932 = vmatprep.mubr.bf16.mxu0 0
      %933 = vmatmul.mubr.bf16.gmra.mxu0 %v762
      %v934 = vpop.f32.mrf.mxu0
      %v935 = vadd.f32 %v858, %v934
      %v936 = vpop.f32.mrf.mxu0
      %v937 = vpop.f32.mrf.mxu0
      %v938 = vadd.f32 %v858, %v937
      %v939 = vpop.f32.mrf.mxu0
      %940 = vmatprep.mubr.bf16.mxu0 0
      %941 = vmatmul.mubr.bf16.gmra.mxu0 %v765
      %v942 = vpop.f32.mrf.mxu0
      %v943 = vadd.f32 %v858, %v942
      %v944 = vpop.f32.mrf.mxu0
      %v945 = vpop.f32.mrf.mxu0
      %v946 = vadd.f32 %v858, %v945
      %v947 = vpop.f32.mrf.mxu0
      %948 = vmatprep.mubr.bf16.mxu0 0
      %949 = vmatmul.mubr.bf16.gmra.mxu0 %v768
      %v950 = vpop.f32.mrf.mxu0
      %v951 = vadd.f32 %v858, %v950
      %v952 = vpop.f32.mrf.mxu0
      %v953 = vpop.f32.mrf.mxu0
      %v954 = vadd.f32 %v858, %v953
      %v955 = vpop.f32.mrf.mxu0
      %956 = vmatprep.mubr.bf16.mxu0 0
      %957 = vmatmul.mubr.bf16.gmra.mxu0 %v771
      %v958 = vpop.f32.mrf.mxu0
      %v959 = vadd.f32 %v858, %v958
      %v960 = vpop.f32.mrf.mxu0
      %v961 = vpop.f32.mrf.mxu0
      %v962 = vadd.f32 %v858, %v961
      %v963 = vpop.f32.mrf.mxu0
      %964 = vdwg.mxu0
      %v965 = vxor.u32 %v919, 2147483648
      %v966 = vxor.u32 %v922, 2147483648
      %v967 = vxor.u32 %v927, 2147483648
      %v968 = vxor.u32 %v930, 2147483648
      %v969 = vxor.u32 %v935, 2147483648
      %v970 = vxor.u32 %v938, 2147483648
      %v971 = vxor.u32 %v943, 2147483648
      %v972 = vxor.u32 %v946, 2147483648
      %v973 = vxor.u32 %v951, 2147483648
      %v974 = vxor.u32 %v954, 2147483648
      %v975 = vxor.u32 %v959, 2147483648
      %v976 = vxor.u32 %v962, 2147483648
      %v977 = vmul.f32 %v965, 1.442695
      %v978 = vpow.pop %v977
      %v979 = vmul.f32 %v966, 1.442695
      %v980 = vpow.pop %v979
      %v981 = vmul.f32 %v967, 1.442695
      %v982 = vpow.pop %v981
      %v983 = vmul.f32 %v968, 1.442695
      %v984 = vpow.pop %v983
      %v985 = vmul.f32 %v969, 1.442695
      %v986 = vpow.pop %v985
      %v987 = vmul.f32 %v970, 1.442695
      %v988 = vpow.pop %v987
      %v989 = vmul.f32 %v971, 1.442695
      %v990 = vpow.pop %v989
      %v991 = vmul.f32 %v972, 1.442695
      %v992 = vpow.pop %v991
      %v993 = vmul.f32 %v973, 1.442695
      %v994 = vpow.pop %v993
      %v995 = vmul.f32 %v974, 1.442695
      %v996 = vpow.pop %v995
      %v997 = vmul.f32 %v975, 1.442695
      %v998 = vpow.pop %v997
      %v999 = vmul.f32 %v976, 1.442695
      %v1000 = vpow.pop %v999
      %v1001 = vadd.f32 %v978, 1.0
      %v1002 = vadd.f32 %v980, 1.0
      %v1003 = vadd.f32 %v982, 1.0
      %v1004 = vadd.f32 %v984, 1.0
      %v1005 = vadd.f32 %v986, 1.0
      %v1006 = vadd.f32 %v988, 1.0
      %v1007 = vadd.f32 %v990, 1.0
      %v1008 = vadd.f32 %v992, 1.0
      %v1009 = vadd.f32 %v994, 1.0
      %v1010 = vadd.f32 %v996, 1.0
      %v1011 = vadd.f32 %v998, 1.0
      %v1012 = vadd.f32 %v1000, 1.0
      %v1013 = vrcp.pop %v1001
      %v1014 = vmul.f32 1.0, %v1013
      %v1015 = vrcp.pop %v1002
      %v1016 = vmul.f32 1.0, %v1015
      %v1017 = vrcp.pop %v1003
      %v1018 = vmul.f32 1.0, %v1017
      %v1019 = vrcp.pop %v1004
      %v1020 = vmul.f32 1.0, %v1019
      %v1021 = vrcp.pop %v1005
      %v1022 = vmul.f32 1.0, %v1021
      %v1023 = vrcp.pop %v1006
      %v1024 = vmul.f32 1.0, %v1023
      %v1025 = vrcp.pop %v1007
      %v1026 = vmul.f32 1.0, %v1025
      %v1027 = vrcp.pop %v1008
      %v1028 = vmul.f32 1.0, %v1027
      %v1029 = vrcp.pop %v1009
      %v1030 = vmul.f32 1.0, %v1029
      %v1031 = vrcp.pop %v1010
      %v1032 = vmul.f32 1.0, %v1031
      %v1033 = vrcp.pop %v1011
      %v1034 = vmul.f32 1.0, %v1033
      %v1035 = vrcp.pop %v1012
      %v1036 = vmul.f32 1.0, %v1035
      %v1037 = vmul.f32 %v808, %v1014
      %v1038 = vmul.f32 %v811, %v1016
      %v1039 = vmul.f32 %v816, %v1018
      %v1040 = vmul.f32 %v819, %v1020
      %v1041 = vmul.f32 %v824, %v1022
      %v1042 = vmul.f32 %v827, %v1024
      %v1043 = vmul.f32 %v832, %v1026
      %v1044 = vmul.f32 %v835, %v1028
      %v1045 = vmul.f32 %v840, %v1030
      %v1046 = vmul.f32 %v843, %v1032
      %v1047 = vmul.f32 %v848, %v1034
      %v1048 = vmul.f32 %v851, %v1036
      %v1049 = vpack.c.bf16 %v1038, %v1037
      %v1050 = vpack.c.bf16 %v1040, %v1039
      %v1051 = vpack.c.bf16 %v1042, %v1041
      %v1052 = vpack.c.bf16 %v1044, %v1043
      %v1053 = vpack.c.bf16 %v1046, %v1045
      %v1054 = vpack.c.bf16 %v1048, %v1047
      %vm1055 = vcmask 785408
      %v1057 = vsel %vm1055, %v259, 0
      %v1060 = vsel %vm1055, %v260, 0
      %1062 = vmatprep.subr.bf16.mxu0 0
      %1063 = vmatpush1.bf16.msra.mxu0 0
      %1064 = vmatprep.subr.bf16.mxu0 0
      %1065 = vmatpush1.bf16.msra.mxu0 0
      %1066 = vmatprep.subr.bf16.mxu0 0
      %1067 = vmatpush1.bf16.msra.mxu0 %v1054
      %1068 = vmatprep.subr.bf16.mxu0 0
      %1069 = vmatpush1.bf16.msra.mxu0 %v1053
      %1070 = vmatprep.subr.bf16.mxu0 0
      %1071 = vmatpush1.bf16.msra.mxu0 %v1052
      %1072 = vmatprep.subr.bf16.mxu0 0
      %1073 = vmatpush1.bf16.msra.mxu0 %v1051
      %1074 = vmatprep.subr.bf16.mxu0 0
      %1075 = vmatpush1.bf16.msra.mxu0 %v1050
      %1076 = vmatprep.subr.bf16.mxu0 0
      %1077 = vmatpush1.bf16.msra.mxu0 %v1049
      %1078 = vmatprep.subr.bf16.mxu0 0
      %1079 = vmatpush2.bf16.msra.mxu0 0
      %1080 = vmatprep.subr.bf16.mxu0 0
      %1081 = vmatpush2.bf16.msra.mxu0 0
      %1082 = vmatprep.subr.bf16.mxu0 0
      %1083 = vmatpush2.bf16.msra.mxu0 0
      %1084 = vmatprep.subr.bf16.mxu0 0
      %1085 = vmatpush2.bf16.msra.mxu0 0
      %1086 = vmatprep.subr.bf16.mxu0 0
      %1087 = vmatpush2.bf16.msra.mxu0 0
      %1088 = vmatprep.subr.bf16.mxu0 0
      %1089 = vmatpush2.bf16.msra.mxu0 0
      %1090 = vmatprep.subr.bf16.mxu0 0
      %1091 = vmatpush2.bf16.msra.mxu0 0
      %1092 = vmatprep.subr.bf16.mxu0 0
      %1093 = vmatpush2.bf16.msra.mxu0 0
      %1094 = vmatprep.mubr.bf16.mxu0 0
      %1095 = vmatmul.mubr.bf16.gmra.mxu0 %v1057
      %v1096 = vpop.f32.mrf.mxu0
      %v1097 = vadd.f32 0.0, %v1096
      %v1098 = vpop.f32.mrf.mxu0
      %v1099 = vpop.f32.mrf.mxu0
      %v1100 = vadd.f32 0.0, %v1099
      %v1101 = vpop.f32.mrf.mxu0
      %1102 = vmatprep.mubr.bf16.mxu0 0
      %1103 = vmatmul.mubr.bf16.gmra.mxu0 %v1060
      %v1104 = vpop.f32.mrf.mxu0
      %v1105 = vadd.f32 0.0, %v1104
      %v1106 = vpop.f32.mrf.mxu0
      %v1107 = vpop.f32.mrf.mxu0
      %v1108 = vadd.f32 0.0, %v1107
      %v1109 = vpop.f32.mrf.mxu0
      %1110 = vdwg.mxu0
      %v1111 = vpack.c.bf16 %v1100, %v1097
      %v1112 = vpack.c.bf16 %v1108, %v1105
      %v1117 = vunpack.c.l.b16 %v365
      %v1118 = vunpack.c.l.b16 %v366
      %v1119 = vunpack.c.l.b16 %v367
      %v1120 = vunpack.c.l.b16 %v368
      %v1121 = vpack.c.b16 %v1118, %v1117
      %v1122 = vpack.c.b16 %v1120, %v1119
      %1125 = vmatprep.subr.bf16.mxu0 0
      %1126 = vmatpush1.bf16.msra.mxu0 0
      %1127 = vmatprep.subr.bf16.mxu0 0
      %1128 = vmatpush1.bf16.msra.mxu0 0
      %1129 = vmatprep.subr.bf16.mxu0 0
      %1130 = vmatpush1.bf16.msra.mxu0 0
      %1131 = vmatprep.subr.bf16.mxu0 0
      %1132 = vmatpush1.bf16.msra.mxu0 0
      %1133 = vmatprep.subr.bf16.mxu0 0
      %1134 = vmatpush1.bf16.msra.mxu0 0
      %1135 = vmatprep.subr.bf16.mxu0 0
      %1136 = vmatpush1.bf16.msra.mxu0 0
      %1137 = vmatprep.subr.bf16.mxu0 0
      %1138 = vmatpush1.bf16.msra.mxu0 %v1122
      %1139 = vmatprep.subr.bf16.mxu0 0
      %1140 = vmatpush1.bf16.msra.mxu0 %v1121
      %1141 = vmatprep.subr.bf16.mxu0 0
      %1142 = vmatpush2.bf16.msra.mxu0 0
      %1143 = vmatprep.subr.bf16.mxu0 0
      %1144 = vmatpush2.bf16.msra.mxu0 0
      %1145 = vmatprep.subr.bf16.mxu0 0
      %1146 = vmatpush2.bf16.msra.mxu0 0
      %1147 = vmatprep.subr.bf16.mxu0 0
      %1148 = vmatpush2.bf16.msra.mxu0 0
      %1149 = vmatprep.subr.bf16.mxu0 0
      %1150 = vmatpush2.bf16.msra.mxu0 0
      %1151 = vmatprep.subr.bf16.mxu0 0
      %1152 = vmatpush2.bf16.msra.mxu0 0
      %1153 = vmatprep.subr.bf16.mxu0 0
      %1154 = vmatpush2.bf16.msra.mxu0 0
      %1155 = vmatprep.subr.bf16.mxu0 0
      %1156 = vmatpush2.bf16.msra.mxu0 0
      %1157 = vmatprep.mubr.bf16.mxu0 0
      %1158 = vmatmul.mubr.bf16.gmra.mxu0 %v551
      %v1159 = vpop.f32.mrf.mxu0
      %v1160 = vadd.f32 0.0, %v1159
      %v1161 = vpop.f32.mrf.mxu0
      %v1162 = vpop.f32.mrf.mxu0
      %v1163 = vadd.f32 0.0, %v1162
      %v1164 = vpop.f32.mrf.mxu0
      %1165 = vmatprep.mubr.bf16.mxu0 0
      %1166 = vmatmul.mubr.bf16.gmra.mxu0 %v554
      %v1167 = vpop.f32.mrf.mxu0
      %v1168 = vadd.f32 0.0, %v1167
      %v1169 = vpop.f32.mrf.mxu0
      %v1170 = vpop.f32.mrf.mxu0
      %v1171 = vadd.f32 0.0, %v1170
      %v1172 = vpop.f32.mrf.mxu0
      %1173 = vdwg.mxu0
      %v1178 = vunpack.c.l.b16 %v343
      %v1179 = vunpack.c.l.b16 %v344
      %v1180 = vunpack.c.l.b16 %v345
      %v1181 = vunpack.c.l.b16 %v346
      %v1182 = vpack.c.b16 %v1179, %v1178
      %v1183 = vpack.c.b16 %v1181, %v1180
      %v1187 = vsel %vm549, %v1111, 0
      %v1190 = vsel %vm549, %v1112, 0
      %1192 = vmatprep.subr.bf16.mxu0 0
      %1193 = vmatpush1.bf16.msra.mxu0 0
      %1194 = vmatprep.subr.bf16.mxu0 0
      %1195 = vmatpush1.bf16.msra.mxu0 0
      %1196 = vmatprep.subr.bf16.mxu0 0
      %1197 = vmatpush1.bf16.msra.mxu0 0
      %1198 = vmatprep.subr.bf16.mxu0 0
      %1199 = vmatpush1.bf16.msra.mxu0 0
      %1200 = vmatprep.subr.bf16.mxu0 0
      %1201 = vmatpush1.bf16.msra.mxu0 0
      %1202 = vmatprep.subr.bf16.mxu0 0
      %1203 = vmatpush1.bf16.msra.mxu0 0
      %1204 = vmatprep.subr.bf16.mxu0 0
      %1205 = vmatpush1.bf16.msra.mxu0 %v1183
      %1206 = vmatprep.subr.bf16.mxu0 0
      %1207 = vmatpush1.bf16.msra.mxu0 %v1182
      %1208 = vmatprep.subr.bf16.mxu0 0
      %1209 = vmatpush2.bf16.msra.mxu0 0
      %1210 = vmatprep.subr.bf16.mxu0 0
      %1211 = vmatpush2.bf16.msra.mxu0 0
      %1212 = vmatprep.subr.bf16.mxu0 0
      %1213 = vmatpush2.bf16.msra.mxu0 0
      %1214 = vmatprep.subr.bf16.mxu0 0
      %1215 = vmatpush2.bf16.msra.mxu0 0
      %1216 = vmatprep.subr.bf16.mxu0 0
      %1217 = vmatpush2.bf16.msra.mxu0 0
      %1218 = vmatprep.subr.bf16.mxu0 0
      %1219 = vmatpush2.bf16.msra.mxu0 0
      %1220 = vmatprep.subr.bf16.mxu0 0
      %1221 = vmatpush2.bf16.msra.mxu0 0
      %1222 = vmatprep.subr.bf16.mxu0 0
      %1223 = vmatpush2.bf16.msra.mxu0 0
      %1224 = vmatprep.mubr.bf16.mxu0 0
      %1225 = vmatmul.mubr.bf16.gmra.mxu0 %v1187
      %v1226 = vpop.f32.mrf.mxu0
      %v1227 = vadd.f32 %v1160, %v1226
      %v1228 = vpop.f32.mrf.mxu0
      %v1229 = vpop.f32.mrf.mxu0
      %v1230 = vadd.f32 %v1163, %v1229
      %v1231 = vpop.f32.mrf.mxu0
      %1232 = vmatprep.mubr.bf16.mxu0 0
      %1233 = vmatmul.mubr.bf16.gmra.mxu0 %v1190
      %v1234 = vpop.f32.mrf.mxu0
      %v1235 = vadd.f32 %v1168, %v1234
      %v1236 = vpop.f32.mrf.mxu0
      %v1237 = vpop.f32.mrf.mxu0
      %v1238 = vadd.f32 %v1171, %v1237
      %v1239 = vpop.f32.mrf.mxu0
      %1240 = vdwg.mxu0
      %v1242 = vlaneseq
      %v1243 = vshrl.u32 %v1242, 7
      %v1244 = vsub.s32 0, %v1243
      %v1245 = vrot.slane %v385, %v1244
      %v1247 = vadd.f32 %v1227, %v1245
      %v1248 = vadd.f32 %v1230, %v1245
      %v1249 = vadd.f32 %v1235, %v1245
      %v1250 = vadd.f32 %v1238, %v1245
      %v1251 = vxor.u32 %v1247, 2147483648
      %v1252 = vxor.u32 %v1248, 2147483648
      %v1253 = vxor.u32 %v1249, 2147483648
      %v1254 = vxor.u32 %v1250, 2147483648
      %v1255 = vmul.f32 %v1251, 1.442695
      %v1256 = vpow.pop %v1255
      %v1257 = vmul.f32 %v1252, 1.442695
      %v1258 = vpow.pop %v1257
      %v1259 = vmul.f32 %v1253, 1.442695
      %v1260 = vpow.pop %v1259
      %v1261 = vmul.f32 %v1254, 1.442695
      %v1262 = vpow.pop %v1261
      %v1263 = vadd.f32 %v1256, 1.0
      %v1264 = vadd.f32 %v1258, 1.0
      %v1265 = vadd.f32 %v1260, 1.0
      %v1266 = vadd.f32 %v1262, 1.0
      %v1267 = vrcp.pop %v1263
      %v1268 = vmul.f32 1.0, %v1267
      %v1269 = vrcp.pop %v1264
      %v1270 = vmul.f32 1.0, %v1269
      %v1271 = vrcp.pop %v1265
      %v1272 = vmul.f32 1.0, %v1271
      %v1273 = vrcp.pop %v1266
      %v1274 = vmul.f32 1.0, %v1273
      %v1279 = vunpack.c.l.b16 %v371
      %v1280 = vunpack.c.l.b16 %v372
      %v1281 = vunpack.c.l.b16 %v373
      %v1282 = vunpack.c.l.b16 %v374
      %v1283 = vpack.c.b16 %v1280, %v1279
      %v1284 = vpack.c.b16 %v1282, %v1281
      %1287 = vmatprep.subr.bf16.mxu0 0
      %1288 = vmatpush1.bf16.msra.mxu0 0
      %1289 = vmatprep.subr.bf16.mxu0 0
      %1290 = vmatpush1.bf16.msra.mxu0 0
      %1291 = vmatprep.subr.bf16.mxu0 0
      %1292 = vmatpush1.bf16.msra.mxu0 0
      %1293 = vmatprep.subr.bf16.mxu0 0
      %1294 = vmatpush1.bf16.msra.mxu0 0
      %1295 = vmatprep.subr.bf16.mxu0 0
      %1296 = vmatpush1.bf16.msra.mxu0 0
      %1297 = vmatprep.subr.bf16.mxu0 0
      %1298 = vmatpush1.bf16.msra.mxu0 0
      %1299 = vmatprep.subr.bf16.mxu0 0
      %1300 = vmatpush1.bf16.msra.mxu0 %v1284
      %1301 = vmatprep.subr.bf16.mxu0 0
      %1302 = vmatpush1.bf16.msra.mxu0 %v1283
      %1303 = vmatprep.subr.bf16.mxu0 0
      %1304 = vmatpush2.bf16.msra.mxu0 0
      %1305 = vmatprep.subr.bf16.mxu0 0
      %1306 = vmatpush2.bf16.msra.mxu0 0
      %1307 = vmatprep.subr.bf16.mxu0 0
      %1308 = vmatpush2.bf16.msra.mxu0 0
      %1309 = vmatprep.subr.bf16.mxu0 0
      %1310 = vmatpush2.bf16.msra.mxu0 0
      %1311 = vmatprep.subr.bf16.mxu0 0
      %1312 = vmatpush2.bf16.msra.mxu0 0
      %1313 = vmatprep.subr.bf16.mxu0 0
      %1314 = vmatpush2.bf16.msra.mxu0 0
      %1315 = vmatprep.subr.bf16.mxu0 0
      %1316 = vmatpush2.bf16.msra.mxu0 0
      %1317 = vmatprep.subr.bf16.mxu0 0
      %1318 = vmatpush2.bf16.msra.mxu0 0
      %1319 = vmatprep.mubr.bf16.mxu0 0
      %1320 = vmatmul.mubr.bf16.gmra.mxu0 %v551
      %v1321 = vpop.f32.mrf.mxu0
      %v1322 = vadd.f32 0.0, %v1321
      %v1323 = vpop.f32.mrf.mxu0
      %v1324 = vpop.f32.mrf.mxu0
      %v1325 = vadd.f32 0.0, %v1324
      %v1326 = vpop.f32.mrf.mxu0
      %1327 = vmatprep.mubr.bf16.mxu0 0
      %1328 = vmatmul.mubr.bf16.gmra.mxu0 %v554
      %v1329 = vpop.f32.mrf.mxu0
      %v1330 = vadd.f32 0.0, %v1329
      %v1331 = vpop.f32.mrf.mxu0
      %v1332 = vpop.f32.mrf.mxu0
      %v1333 = vadd.f32 0.0, %v1332
      %v1334 = vpop.f32.mrf.mxu0
      %1335 = vdwg.mxu0
      %v1340 = vunpack.c.l.b16 %v351
      %v1341 = vunpack.c.l.b16 %v352
      %v1342 = vunpack.c.l.b16 %v353
      %v1343 = vunpack.c.l.b16 %v354
      %v1344 = vpack.c.b16 %v1341, %v1340
      %v1345 = vpack.c.b16 %v1343, %v1342
      %1348 = vmatprep.subr.bf16.mxu0 0
      %1349 = vmatpush1.bf16.msra.mxu0 0
      %1350 = vmatprep.subr.bf16.mxu0 0
      %1351 = vmatpush1.bf16.msra.mxu0 0
      %1352 = vmatprep.subr.bf16.mxu0 0
      %1353 = vmatpush1.bf16.msra.mxu0 0
      %1354 = vmatprep.subr.bf16.mxu0 0
      %1355 = vmatpush1.bf16.msra.mxu0 0
      %1356 = vmatprep.subr.bf16.mxu0 0
      %1357 = vmatpush1.bf16.msra.mxu0 0
      %1358 = vmatprep.subr.bf16.mxu0 0
      %1359 = vmatpush1.bf16.msra.mxu0 0
      %1360 = vmatprep.subr.bf16.mxu0 0
      %1361 = vmatpush1.bf16.msra.mxu0 %v1345
      %1362 = vmatprep.subr.bf16.mxu0 0
      %1363 = vmatpush1.bf16.msra.mxu0 %v1344
      %1364 = vmatprep.subr.bf16.mxu0 0
      %1365 = vmatpush2.bf16.msra.mxu0 0
      %1366 = vmatprep.subr.bf16.mxu0 0
      %1367 = vmatpush2.bf16.msra.mxu0 0
      %1368 = vmatprep.subr.bf16.mxu0 0
      %1369 = vmatpush2.bf16.msra.mxu0 0
      %1370 = vmatprep.subr.bf16.mxu0 0
      %1371 = vmatpush2.bf16.msra.mxu0 0
      %1372 = vmatprep.subr.bf16.mxu0 0
      %1373 = vmatpush2.bf16.msra.mxu0 0
      %1374 = vmatprep.subr.bf16.mxu0 0
      %1375 = vmatpush2.bf16.msra.mxu0 0
      %1376 = vmatprep.subr.bf16.mxu0 0
      %1377 = vmatpush2.bf16.msra.mxu0 0
      %1378 = vmatprep.subr.bf16.mxu0 0
      %1379 = vmatpush2.bf16.msra.mxu0 0
      %1380 = vmatprep.mubr.bf16.mxu0 0
      %1381 = vmatmul.mubr.bf16.gmra.mxu0 %v1187
      %v1382 = vpop.f32.mrf.mxu0
      %v1383 = vadd.f32 %v1322, %v1382
      %v1384 = vpop.f32.mrf.mxu0
      %v1385 = vpop.f32.mrf.mxu0
      %v1386 = vadd.f32 %v1325, %v1385
      %v1387 = vpop.f32.mrf.mxu0
      %1388 = vmatprep.mubr.bf16.mxu0 0
      %1389 = vmatmul.mubr.bf16.gmra.mxu0 %v1190
      %v1390 = vpop.f32.mrf.mxu0
      %v1391 = vadd.f32 %v1330, %v1390
      %v1392 = vpop.f32.mrf.mxu0
      %v1393 = vpop.f32.mrf.mxu0
      %v1394 = vadd.f32 %v1333, %v1393
      %v1395 = vpop.f32.mrf.mxu0
      %1396 = vdwg.mxu0
      %v1398 = vlaneseq
      %v1399 = vshrl.u32 %v1398, 7
      %v1400 = vsub.s32 0, %v1399
      %v1401 = vrot.slane %v390, %v1400
      %v1403 = vadd.f32 %v1383, %v1401
      %v1404 = vadd.f32 %v1386, %v1401
      %v1405 = vadd.f32 %v1391, %v1401
      %v1406 = vadd.f32 %v1394, %v1401
      %v1407 = vxor.u32 %v1403, 2147483648
      %v1408 = vxor.u32 %v1404, 2147483648
      %v1409 = vxor.u32 %v1405, 2147483648
      %v1410 = vxor.u32 %v1406, 2147483648
      %v1411 = vmul.f32 %v1407, 1.442695
      %v1412 = vpow.pop %v1411
      %v1413 = vmul.f32 %v1408, 1.442695
      %v1414 = vpow.pop %v1413
      %v1415 = vmul.f32 %v1409, 1.442695
      %v1416 = vpow.pop %v1415
      %v1417 = vmul.f32 %v1410, 1.442695
      %v1418 = vpow.pop %v1417
      %v1419 = vadd.f32 %v1412, 1.0
      %v1420 = vadd.f32 %v1414, 1.0
      %v1421 = vadd.f32 %v1416, 1.0
      %v1422 = vadd.f32 %v1418, 1.0
      %v1423 = vrcp.pop %v1419
      %v1424 = vmul.f32 1.0, %v1423
      %v1425 = vrcp.pop %v1420
      %v1426 = vmul.f32 1.0, %v1425
      %v1427 = vrcp.pop %v1421
      %v1428 = vmul.f32 1.0, %v1427
      %v1429 = vrcp.pop %v1422
      %v1430 = vmul.f32 1.0, %v1429
      %v1432 = vlaneseq
      %v1433 = vshrl.u32 %v1432, 7
      %v1434 = vsub.s32 0, %v1433
      %v1435 = vrot.slane %v392, %v1434
      %v1441 = vunpack.c.l.b16 %v359
      %v1442 = vunpack.c.l.b16 %v360
      %v1443 = vunpack.c.l.b16 %v361
      %v1444 = vunpack.c.l.b16 %v362
      %v1445 = vpack.c.b16 %v1442, %v1441
      %v1446 = vpack.c.b16 %v1444, %v1443
      %1449 = vmatprep.subr.bf16.mxu0 0
      %1450 = vmatpush1.bf16.msra.mxu0 0
      %1451 = vmatprep.subr.bf16.mxu0 0
      %1452 = vmatpush1.bf16.msra.mxu0 0
      %1453 = vmatprep.subr.bf16.mxu0 0
      %1454 = vmatpush1.bf16.msra.mxu0 0
      %1455 = vmatprep.subr.bf16.mxu0 0
      %1456 = vmatpush1.bf16.msra.mxu0 0
      %1457 = vmatprep.subr.bf16.mxu0 0
      %1458 = vmatpush1.bf16.msra.mxu0 0
      %1459 = vmatprep.subr.bf16.mxu0 0
      %1460 = vmatpush1.bf16.msra.mxu0 0
      %1461 = vmatprep.subr.bf16.mxu0 0
      %1462 = vmatpush1.bf16.msra.mxu0 %v1446
      %1463 = vmatprep.subr.bf16.mxu0 0
      %1464 = vmatpush1.bf16.msra.mxu0 %v1445
      %1465 = vmatprep.subr.bf16.mxu0 0
      %1466 = vmatpush2.bf16.msra.mxu0 0
      %1467 = vmatprep.subr.bf16.mxu0 0
      %1468 = vmatpush2.bf16.msra.mxu0 0
      %1469 = vmatprep.subr.bf16.mxu0 0
      %1470 = vmatpush2.bf16.msra.mxu0 0
      %1471 = vmatprep.subr.bf16.mxu0 0
      %1472 = vmatpush2.bf16.msra.mxu0 0
      %1473 = vmatprep.subr.bf16.mxu0 0
      %1474 = vmatpush2.bf16.msra.mxu0 0
      %1475 = vmatprep.subr.bf16.mxu0 0
      %1476 = vmatpush2.bf16.msra.mxu0 0
      %1477 = vmatprep.subr.bf16.mxu0 0
      %1478 = vmatpush2.bf16.msra.mxu0 0
      %1479 = vmatprep.subr.bf16.mxu0 0
      %1480 = vmatpush2.bf16.msra.mxu0 0
      %1481 = vmatprep.mubr.bf16.mxu0 0
      %1482 = vmatmul.mubr.bf16.gmra.mxu0 %v1187
      %v1483 = vpop.f32.mrf.mxu0
      %v1484 = vadd.f32 %v1435, %v1483
      %v1485 = vpop.f32.mrf.mxu0
      %v1486 = vpop.f32.mrf.mxu0
      %v1487 = vadd.f32 %v1435, %v1486
      %v1488 = vpop.f32.mrf.mxu0
      %1489 = vmatprep.mubr.bf16.mxu0 0
      %1490 = vmatmul.mubr.bf16.gmra.mxu0 %v1190
      %v1491 = vpop.f32.mrf.mxu0
      %v1492 = vadd.f32 %v1435, %v1491
      %v1493 = vpop.f32.mrf.mxu0
      %v1494 = vpop.f32.mrf.mxu0
      %v1495 = vadd.f32 %v1435, %v1494
      %v1496 = vpop.f32.mrf.mxu0
      %1497 = vdwg.mxu0
      %v1499 = vlaneseq
      %v1500 = vshrl.u32 %v1499, 7
      %v1501 = vsub.s32 0, %v1500
      %v1502 = vrot.slane %v394, %v1501
      %v1508 = vunpack.c.l.b16 %v377
      %v1509 = vunpack.c.l.b16 %v378
      %v1510 = vunpack.c.l.b16 %v379
      %v1511 = vunpack.c.l.b16 %v380
      %v1512 = vpack.c.b16 %v1509, %v1508
      %v1513 = vpack.c.b16 %v1511, %v1510
      %1516 = vmatprep.subr.bf16.mxu0 0
      %1517 = vmatpush1.bf16.msra.mxu0 0
      %1518 = vmatprep.subr.bf16.mxu0 0
      %1519 = vmatpush1.bf16.msra.mxu0 0
      %1520 = vmatprep.subr.bf16.mxu0 0
      %1521 = vmatpush1.bf16.msra.mxu0 0
      %1522 = vmatprep.subr.bf16.mxu0 0
      %1523 = vmatpush1.bf16.msra.mxu0 0
      %1524 = vmatprep.subr.bf16.mxu0 0
      %1525 = vmatpush1.bf16.msra.mxu0 0
      %1526 = vmatprep.subr.bf16.mxu0 0
      %1527 = vmatpush1.bf16.msra.mxu0 0
      %1528 = vmatprep.subr.bf16.mxu0 0
      %1529 = vmatpush1.bf16.msra.mxu0 %v1513
      %1530 = vmatprep.subr.bf16.mxu0 0
      %1531 = vmatpush1.bf16.msra.mxu0 %v1512
      %1532 = vmatprep.subr.bf16.mxu0 0
      %1533 = vmatpush2.bf16.msra.mxu0 0
      %1534 = vmatprep.subr.bf16.mxu0 0
      %1535 = vmatpush2.bf16.msra.mxu0 0
      %1536 = vmatprep.subr.bf16.mxu0 0
      %1537 = vmatpush2.bf16.msra.mxu0 0
      %1538 = vmatprep.subr.bf16.mxu0 0
      %1539 = vmatpush2.bf16.msra.mxu0 0
      %1540 = vmatprep.subr.bf16.mxu0 0
      %1541 = vmatpush2.bf16.msra.mxu0 0
      %1542 = vmatprep.subr.bf16.mxu0 0
      %1543 = vmatpush2.bf16.msra.mxu0 0
      %1544 = vmatprep.subr.bf16.mxu0 0
      %1545 = vmatpush2.bf16.msra.mxu0 0
      %1546 = vmatprep.subr.bf16.mxu0 0
      %1547 = vmatpush2.bf16.msra.mxu0 0
      %1548 = vmatprep.mubr.bf16.mxu0 0
      %1549 = vmatmul.mubr.bf16.gmra.mxu0 %v551
      %v1550 = vpop.f32.mrf.mxu0
      %v1551 = vadd.f32 %v1502, %v1550
      %v1552 = vpop.f32.mrf.mxu0
      %v1553 = vpop.f32.mrf.mxu0
      %v1554 = vadd.f32 %v1502, %v1553
      %v1555 = vpop.f32.mrf.mxu0
      %1556 = vmatprep.mubr.bf16.mxu0 0
      %1557 = vmatmul.mubr.bf16.gmra.mxu0 %v554
      %v1558 = vpop.f32.mrf.mxu0
      %v1559 = vadd.f32 %v1502, %v1558
      %v1560 = vpop.f32.mrf.mxu0
      %v1561 = vpop.f32.mrf.mxu0
      %v1562 = vadd.f32 %v1502, %v1561
      %v1563 = vpop.f32.mrf.mxu0
      %1564 = vdwg.mxu0
      %v1565 = vmul.f32 %v1268, %v1551
      %v1566 = vmul.f32 %v1270, %v1554
      %v1567 = vmul.f32 %v1272, %v1559
      %v1568 = vmul.f32 %v1274, %v1562
      %v1569 = vadd.f32 %v1484, %v1565
      %v1570 = vadd.f32 %v1487, %v1566
      %v1571 = vadd.f32 %v1492, %v1567
      %v1572 = vadd.f32 %v1495, %v1568
      %v1573 = vtanh.pop %v1569
      %v1574 = vtanh.pop %v1570
      %v1575 = vtanh.pop %v1571
      %v1576 = vtanh.pop %v1572
      %v1577 = vsub.f32 1.0, %v1424
      %v1578 = vsub.f32 1.0, %v1426
      %v1579 = vsub.f32 1.0, %v1428
      %v1580 = vsub.f32 1.0, %v1430
      %v1581 = vmul.f32 %v1577, %v1573
      %v1582 = vmul.f32 %v1578, %v1574
      %v1583 = vmul.f32 %v1579, %v1575
      %v1584 = vmul.f32 %v1580, %v1576
      %v1585 = vmul.f32 %v1424, %v295
      %v1586 = vmul.f32 %v1426, %v296
      %v1587 = vmul.f32 %v1428, %v297
      %v1588 = vmul.f32 %v1430, %v298
      %v1589 = vadd.f32 %v1581, %v1585
      %v1590 = vadd.f32 %v1582, %v1586
      %v1591 = vadd.f32 %v1583, %v1587
      %v1592 = vadd.f32 %v1584, %v1588
      %v1593 = vpack.c.bf16 %v1590, %v1589
      %v1594 = vpack.c.bf16 %v1592, %v1591
      %v1596 = vsel %vm549, %v1593, 0
      %v1599 = vsel %vm549, %v1594, 0
      %1601 = vmatprep.subr.bf16.mxu0 0
      %1602 = vmatpush1.bf16.msra.mxu0 0
      %1603 = vmatprep.subr.bf16.mxu0 0
      %1604 = vmatpush1.bf16.msra.mxu0 0
      %1605 = vmatprep.subr.bf16.mxu0 0
      %1606 = vmatpush1.bf16.msra.mxu0 0
      %1607 = vmatprep.subr.bf16.mxu0 0
      %1608 = vmatpush1.bf16.msra.mxu0 0
      %1609 = vmatprep.subr.bf16.mxu0 0
      %1610 = vmatpush1.bf16.msra.mxu0 0
      %1611 = vmatprep.subr.bf16.mxu0 0
      %1612 = vmatpush1.bf16.msra.mxu0 0
      %1613 = vmatprep.subr.bf16.mxu0 0
      %1614 = vmatpush1.bf16.msra.mxu0 %v546
      %1615 = vmatprep.subr.bf16.mxu0 0
      %1616 = vmatpush1.bf16.msra.mxu0 %v545
      %1617 = vmatprep.subr.bf16.mxu0 0
      %1618 = vmatpush2.bf16.msra.mxu0 0
      %1619 = vmatprep.subr.bf16.mxu0 0
      %1620 = vmatpush2.bf16.msra.mxu0 0
      %1621 = vmatprep.subr.bf16.mxu0 0
      %1622 = vmatpush2.bf16.msra.mxu0 0
      %1623 = vmatprep.subr.bf16.mxu0 0
      %1624 = vmatpush2.bf16.msra.mxu0 0
      %1625 = vmatprep.subr.bf16.mxu0 0
      %1626 = vmatpush2.bf16.msra.mxu0 0
      %1627 = vmatprep.subr.bf16.mxu0 0
      %1628 = vmatpush2.bf16.msra.mxu0 0
      %1629 = vmatprep.subr.bf16.mxu0 0
      %1630 = vmatpush2.bf16.msra.mxu0 0
      %1631 = vmatprep.subr.bf16.mxu0 0
      %1632 = vmatpush2.bf16.msra.mxu0 0
      %1633 = vmatprep.mubr.bf16.mxu0 0
      %1634 = vmatmul.mubr.bf16.gmra.mxu0 %v1596
      %v1635 = vpop.f32.mrf.mxu0
      %v1636 = vadd.f32 0.0, %v1635
      %v1637 = vpop.f32.mrf.mxu0
      %v1638 = vpop.f32.mrf.mxu0
      %v1639 = vadd.f32 0.0, %v1638
      %v1640 = vpop.f32.mrf.mxu0
      %1641 = vmatprep.mubr.bf16.mxu0 0
      %1642 = vmatmul.mubr.bf16.gmra.mxu0 %v1599
      %v1643 = vpop.f32.mrf.mxu0
      %v1644 = vadd.f32 0.0, %v1643
      %v1645 = vpop.f32.mrf.mxu0
      %v1646 = vpop.f32.mrf.mxu0
      %v1647 = vadd.f32 0.0, %v1646
      %v1648 = vpop.f32.mrf.mxu0
      %1649 = vdwg.mxu0
      %v1650 = vpack.c.bf16 %v1639, %v1636
      %v1651 = vpack.c.bf16 %v1647, %v1644
      %1652 = vmatprep.subr.bf16.mxu0 0
      %1653 = vmatpush1.bf16.msra.mxu0 0
      %1654 = vmatprep.subr.bf16.mxu0 0
      %1655 = vmatpush1.bf16.msra.mxu0 0
      %1656 = vmatprep.subr.bf16.mxu0 0
      %1657 = vmatpush1.bf16.msra.mxu0 0
      %1658 = vmatprep.subr.bf16.mxu0 0
      %1659 = vmatpush1.bf16.msra.mxu0 0
      %1660 = vmatprep.subr.bf16.mxu0 0
      %1661 = vmatpush1.bf16.msra.mxu0 0
      %1662 = vmatprep.subr.bf16.mxu0 0
      %1663 = vmatpush1.bf16.msra.mxu0 0
      %1664 = vmatprep.subr.bf16.mxu0 0
      %1665 = vmatpush1.bf16.msra.mxu0 %v1651
      %1666 = vmatprep.subr.bf16.mxu0 0
      %1667 = vmatpush1.bf16.msra.mxu0 %v1650
      %1668 = vmatprep.subr.bf16.mxu0 0
      %1669 = vmatpush2.bf16.msra.mxu0 0
      %1670 = vmatprep.subr.bf16.mxu0 0
      %1671 = vmatpush2.bf16.msra.mxu0 0
      %1672 = vmatprep.subr.bf16.mxu0 0
      %1673 = vmatpush2.bf16.msra.mxu0 0
      %1674 = vmatprep.subr.bf16.mxu0 0
      %1675 = vmatpush2.bf16.msra.mxu0 0
      %1676 = vmatprep.subr.bf16.mxu0 0
      %1677 = vmatpush2.bf16.msra.mxu0 0
      %1678 = vmatprep.subr.bf16.mxu0 0
      %1679 = vmatpush2.bf16.msra.mxu0 0
      %1680 = vmatprep.subr.bf16.mxu0 0
      %1681 = vmatpush2.bf16.msra.mxu0 0
      %1682 = vmatprep.subr.bf16.mxu0 0
      %1683 = vmatpush2.bf16.msra.mxu0 0
      %1684 = vmatprep.mubr.bf16.mxu0 0
      %1685 = vmatmul.mubr.bf16.gmra.mxu0 %v608
      %v1686 = vpop.f32.mrf.mxu0
      %v1687 = vadd.f32 %v489, %v1686
      %v1688 = vpop.f32.mrf.mxu0
      %v1689 = vpop.f32.mrf.mxu0
      %v1690 = vadd.f32 %v492, %v1689
      %v1691 = vpop.f32.mrf.mxu0
      %1692 = vmatprep.mubr.bf16.mxu0 0
      %1693 = vmatmul.mubr.bf16.gmra.mxu0 %v611
      %v1694 = vpop.f32.mrf.mxu0
      %v1695 = vadd.f32 %v497, %v1694
      %v1696 = vpop.f32.mrf.mxu0
      %v1697 = vpop.f32.mrf.mxu0
      %v1698 = vadd.f32 %v500, %v1697
      %v1699 = vpop.f32.mrf.mxu0
      %1700 = vmatprep.mubr.bf16.mxu0 0
      %1701 = vmatmul.mubr.bf16.gmra.mxu0 %v614
      %v1702 = vpop.f32.mrf.mxu0
      %v1703 = vadd.f32 %v505, %v1702
      %v1704 = vpop.f32.mrf.mxu0
      %v1705 = vpop.f32.mrf.mxu0
      %v1706 = vadd.f32 %v508, %v1705
      %v1707 = vpop.f32.mrf.mxu0
      %1708 = vmatprep.mubr.bf16.mxu0 0
      %1709 = vmatmul.mubr.bf16.gmra.mxu0 %v617
      %v1710 = vpop.f32.mrf.mxu0
      %v1711 = vadd.f32 %v513, %v1710
      %v1712 = vpop.f32.mrf.mxu0
      %v1713 = vpop.f32.mrf.mxu0
      %v1714 = vadd.f32 %v516, %v1713
      %v1715 = vpop.f32.mrf.mxu0
      %1716 = vmatprep.mubr.bf16.mxu0 0
      %1717 = vmatmul.mubr.bf16.gmra.mxu0 %v620
      %v1718 = vpop.f32.mrf.mxu0
      %v1719 = vadd.f32 %v521, %v1718
      %v1720 = vpop.f32.mrf.mxu0
      %v1721 = vpop.f32.mrf.mxu0
      %v1722 = vadd.f32 %v524, %v1721
      %v1723 = vpop.f32.mrf.mxu0
      %1724 = vmatprep.mubr.bf16.mxu0 0
      %1725 = vmatmul.mubr.bf16.gmra.mxu0 %v623
      %v1726 = vpop.f32.mrf.mxu0
      %v1727 = vadd.f32 %v529, %v1726
      %v1728 = vpop.f32.mrf.mxu0
      %v1729 = vpop.f32.mrf.mxu0
      %v1730 = vadd.f32 %v532, %v1729
      %v1731 = vpop.f32.mrf.mxu0
      %1732 = vdwg.mxu0
      %v1733 = vmax.f32 %v1687, 0.0
      %v1734 = vmax.f32 %v1690, 0.0
      %v1735 = vmax.f32 %v1695, 0.0
      %v1736 = vmax.f32 %v1698, 0.0
      %v1737 = vmax.f32 %v1703, 0.0
      %v1738 = vmax.f32 %v1706, 0.0
      %v1739 = vmax.f32 %v1711, 0.0
      %v1740 = vmax.f32 %v1714, 0.0
      %v1741 = vmax.f32 %v1719, 0.0
      %v1742 = vmax.f32 %v1722, 0.0
      %v1743 = vmax.f32 %v1727, 0.0
      %v1744 = vmax.f32 %v1730, 0.0
      %v1745 = vpack.c.bf16 %v1734, %v1733
      %v1746 = vpack.c.bf16 %v1736, %v1735
      %v1747 = vpack.c.bf16 %v1738, %v1737
      %v1748 = vpack.c.bf16 %v1740, %v1739
      %v1749 = vpack.c.bf16 %v1742, %v1741
      %v1750 = vpack.c.bf16 %v1744, %v1743
      %v1752 = vsel %vm754, %v1745, 0
      %v1755 = vsel %vm754, %v1746, 0
      %v1758 = vsel %vm754, %v1747, 0
      %v1761 = vsel %vm754, %v1748, 0
      %v1764 = vsel %vm754, %v1749, 0
      %v1767 = vsel %vm754, %v1750, 0
      %1769 = vmatprep.subr.bf16.mxu0 0
      %1770 = vmatpush1.bf16.msra.mxu0 0
      %1771 = vmatprep.subr.bf16.mxu0 0
      %1772 = vmatpush1.bf16.msra.mxu0 0
      %1773 = vmatprep.subr.bf16.mxu0 0
      %1774 = vmatpush1.bf16.msra.mxu0 0
      %1775 = vmatprep.subr.bf16.mxu0 0
      %1776 = vmatpush1.bf16.msra.mxu0 0
      %1777 = vmatprep.subr.bf16.mxu0 0
      %1778 = vmatpush1.bf16.msra.mxu0 %v749
      %1779 = vmatprep.subr.bf16.mxu0 0
      %1780 = vmatpush1.bf16.msra.mxu0 %v748
      %1781 = vmatprep.subr.bf16.mxu0 0
      %1782 = vmatpush1.bf16.msra.mxu0 %v747
      %1783 = vmatprep.subr.bf16.mxu0 0
      %1784 = vmatpush1.bf16.msra.mxu0 %v746
      %1785 = vmatprep.subr.bf16.mxu0 0
      %1786 = vmatpush2.bf16.msra.mxu0 0
      %1787 = vmatprep.subr.bf16.mxu0 0
      %1788 = vmatpush2.bf16.msra.mxu0 0
      %1789 = vmatprep.subr.bf16.mxu0 0
      %1790 = vmatpush2.bf16.msra.mxu0 0
      %1791 = vmatprep.subr.bf16.mxu0 0
      %1792 = vmatpush2.bf16.msra.mxu0 0
      %1793 = vmatprep.subr.bf16.mxu0 0
      %1794 = vmatpush2.bf16.msra.mxu0 0
      %1795 = vmatprep.subr.bf16.mxu0 0
      %1796 = vmatpush2.bf16.msra.mxu0 0
      %1797 = vmatprep.subr.bf16.mxu0 0
      %1798 = vmatpush2.bf16.msra.mxu0 0
      %1799 = vmatprep.subr.bf16.mxu0 0
      %1800 = vmatpush2.bf16.msra.mxu0 0
      %1801 = vmatprep.mubr.bf16.mxu0 0
      %1802 = vmatmul.mubr.bf16.gmra.mxu0 %v1752
      %v1803 = vpop.f32.mrf.mxu0
      %v1804 = vadd.f32 %v728, %v1803
      %v1805 = vpop.f32.mrf.mxu0
      %v1806 = vpop.f32.mrf.mxu0
      %v1807 = vadd.f32 %v728, %v1806
      %v1808 = vpop.f32.mrf.mxu0
      %1809 = vmatprep.mubr.bf16.mxu0 0
      %1810 = vmatmul.mubr.bf16.gmra.mxu0 %v1755
      %v1811 = vpop.f32.mrf.mxu0
      %v1812 = vadd.f32 %v728, %v1811
      %v1813 = vpop.f32.mrf.mxu0
      %v1814 = vpop.f32.mrf.mxu0
      %v1815 = vadd.f32 %v728, %v1814
      %v1816 = vpop.f32.mrf.mxu0
      %1817 = vmatprep.mubr.bf16.mxu0 0
      %1818 = vmatmul.mubr.bf16.gmra.mxu0 %v1758
      %v1819 = vpop.f32.mrf.mxu0
      %v1820 = vadd.f32 %v728, %v1819
      %v1821 = vpop.f32.mrf.mxu0
      %v1822 = vpop.f32.mrf.mxu0
      %v1823 = vadd.f32 %v728, %v1822
      %v1824 = vpop.f32.mrf.mxu0
      %1825 = vmatprep.mubr.bf16.mxu0 0
      %1826 = vmatmul.mubr.bf16.gmra.mxu0 %v1761
      %v1827 = vpop.f32.mrf.mxu0
      %v1828 = vadd.f32 %v728, %v1827
      %v1829 = vpop.f32.mrf.mxu0
      %v1830 = vpop.f32.mrf.mxu0
      %v1831 = vadd.f32 %v728, %v1830
      %v1832 = vpop.f32.mrf.mxu0
      %1833 = vmatprep.mubr.bf16.mxu0 0
      %1834 = vmatmul.mubr.bf16.gmra.mxu0 %v1764
      %v1835 = vpop.f32.mrf.mxu0
      %v1836 = vadd.f32 %v728, %v1835
      %v1837 = vpop.f32.mrf.mxu0
      %v1838 = vpop.f32.mrf.mxu0
      %v1839 = vadd.f32 %v728, %v1838
      %v1840 = vpop.f32.mrf.mxu0
      %1841 = vmatprep.mubr.bf16.mxu0 0
      %1842 = vmatmul.mubr.bf16.gmra.mxu0 %v1767
      %v1843 = vpop.f32.mrf.mxu0
      %v1844 = vadd.f32 %v728, %v1843
      %v1845 = vpop.f32.mrf.mxu0
      %v1846 = vpop.f32.mrf.mxu0
      %v1847 = vadd.f32 %v728, %v1846
      %v1848 = vpop.f32.mrf.mxu0
      %1849 = vdwg.mxu0
      %1850 = vmatprep.subr.bf16.mxu0 0
      %1851 = vmatpush1.bf16.msra.mxu0 0
      %1852 = vmatprep.subr.bf16.mxu0 0
      %1853 = vmatpush1.bf16.msra.mxu0 0
      %1854 = vmatprep.subr.bf16.mxu0 0
      %1855 = vmatpush1.bf16.msra.mxu0 0
      %1856 = vmatprep.subr.bf16.mxu0 0
      %1857 = vmatpush1.bf16.msra.mxu0 0
      %1858 = vmatprep.subr.bf16.mxu0 0
      %1859 = vmatpush1.bf16.msra.mxu0 %v879
      %1860 = vmatprep.subr.bf16.mxu0 0
      %1861 = vmatpush1.bf16.msra.mxu0 %v878
      %1862 = vmatprep.subr.bf16.mxu0 0
      %1863 = vmatpush1.bf16.msra.mxu0 %v877
      %1864 = vmatprep.subr.bf16.mxu0 0
      %1865 = vmatpush1.bf16.msra.mxu0 %v876
      %1866 = vmatprep.subr.bf16.mxu0 0
      %1867 = vmatpush2.bf16.msra.mxu0 0
      %1868 = vmatprep.subr.bf16.mxu0 0
      %1869 = vmatpush2.bf16.msra.mxu0 0
      %1870 = vmatprep.subr.bf16.mxu0 0
      %1871 = vmatpush2.bf16.msra.mxu0 0
      %1872 = vmatprep.subr.bf16.mxu0 0
      %1873 = vmatpush2.bf16.msra.mxu0 0
      %1874 = vmatprep.subr.bf16.mxu0 0
      %1875 = vmatpush2.bf16.msra.mxu0 0
      %1876 = vmatprep.subr.bf16.mxu0 0
      %1877 = vmatpush2.bf16.msra.mxu0 0
      %1878 = vmatprep.subr.bf16.mxu0 0
      %1879 = vmatpush2.bf16.msra.mxu0 0
      %1880 = vmatprep.subr.bf16.mxu0 0
      %1881 = vmatpush2.bf16.msra.mxu0 0
      %1882 = vmatprep.mubr.bf16.mxu0 0
      %1883 = vmatmul.mubr.bf16.gmra.mxu0 %v1752
      %v1884 = vpop.f32.mrf.mxu0
      %v1885 = vadd.f32 %v858, %v1884
      %v1886 = vpop.f32.mrf.mxu0
      %v1887 = vpop.f32.mrf.mxu0
      %v1888 = vadd.f32 %v858, %v1887
      %v1889 = vpop.f32.mrf.mxu0
      %1890 = vmatprep.mubr.bf16.mxu0 0
      %1891 = vmatmul.mubr.bf16.gmra.mxu0 %v1755
      %v1892 = vpop.f32.mrf.mxu0
      %v1893 = vadd.f32 %v858, %v1892
      %v1894 = vpop.f32.mrf.mxu0
      %v1895 = vpop.f32.mrf.mxu0
      %v1896 = vadd.f32 %v858, %v1895
      %v1897 = vpop.f32.mrf.mxu0
      %1898 = vmatprep.mubr.bf16.mxu0 0
      %1899 = vmatmul.mubr.bf16.gmra.mxu0 %v1758
      %v1900 = vpop.f32.mrf.mxu0
      %v1901 = vadd.f32 %v858, %v1900
      %v1902 = vpop.f32.mrf.mxu0
      %v1903 = vpop.f32.mrf.mxu0
      %v1904 = vadd.f32 %v858, %v1903
      %v1905 = vpop.f32.mrf.mxu0
      %1906 = vmatprep.mubr.bf16.mxu0 0
      %1907 = vmatmul.mubr.bf16.gmra.mxu0 %v1761
      %v1908 = vpop.f32.mrf.mxu0
      %v1909 = vadd.f32 %v858, %v1908
      %v1910 = vpop.f32.mrf.mxu0
      %v1911 = vpop.f32.mrf.mxu0
      %v1912 = vadd.f32 %v858, %v1911
      %v1913 = vpop.f32.mrf.mxu0
      %1914 = vmatprep.mubr.bf16.mxu0 0
      %1915 = vmatmul.mubr.bf16.gmra.mxu0 %v1764
      %v1916 = vpop.f32.mrf.mxu0
      %v1917 = vadd.f32 %v858, %v1916
      %v1918 = vpop.f32.mrf.mxu0
      %v1919 = vpop.f32.mrf.mxu0
      %v1920 = vadd.f32 %v858, %v1919
      %v1921 = vpop.f32.mrf.mxu0
      %1922 = vmatprep.mubr.bf16.mxu0 0
      %1923 = vmatmul.mubr.bf16.gmra.mxu0 %v1767
      %v1924 = vpop.f32.mrf.mxu0
      %v1925 = vadd.f32 %v858, %v1924
      %v1926 = vpop.f32.mrf.mxu0
      %v1927 = vpop.f32.mrf.mxu0
      %v1928 = vadd.f32 %v858, %v1927
      %v1929 = vpop.f32.mrf.mxu0
      %1930 = vdwg.mxu0
      %v1931 = vxor.u32 %v1885, 2147483648
      %v1932 = vxor.u32 %v1888, 2147483648
      %v1933 = vxor.u32 %v1893, 2147483648
      %v1934 = vxor.u32 %v1896, 2147483648
      %v1935 = vxor.u32 %v1901, 2147483648
      %v1936 = vxor.u32 %v1904, 2147483648
      %v1937 = vxor.u32 %v1909, 2147483648
      %v1938 = vxor.u32 %v1912, 2147483648
      %v1939 = vxor.u32 %v1917, 2147483648
      %v1940 = vxor.u32 %v1920, 2147483648
      %v1941 = vxor.u32 %v1925, 2147483648
      %v1942 = vxor.u32 %v1928, 2147483648
      %v1943 = vmul.f32 %v1931, 1.442695
      %v1944 = vpow.pop %v1943
      %v1945 = vmul.f32 %v1932, 1.442695
      %v1946 = vpow.pop %v1945
      %v1947 = vmul.f32 %v1933, 1.442695
      %v1948 = vpow.pop %v1947
      %v1949 = vmul.f32 %v1934, 1.442695
      %v1950 = vpow.pop %v1949
      %v1951 = vmul.f32 %v1935, 1.442695
      %v1952 = vpow.pop %v1951
      %v1953 = vmul.f32 %v1936, 1.442695
      %v1954 = vpow.pop %v1953
      %v1955 = vmul.f32 %v1937, 1.442695
      %v1956 = vpow.pop %v1955
      %v1957 = vmul.f32 %v1938, 1.442695
      %v1958 = vpow.pop %v1957
      %v1959 = vmul.f32 %v1939, 1.442695
      %v1960 = vpow.pop %v1959
      %v1961 = vmul.f32 %v1940, 1.442695
      %v1962 = vpow.pop %v1961
      %v1963 = vmul.f32 %v1941, 1.442695
      %v1964 = vpow.pop %v1963
      %v1965 = vmul.f32 %v1942, 1.442695
      %v1966 = vpow.pop %v1965
      %v1967 = vadd.f32 %v1944, 1.0
      %v1968 = vadd.f32 %v1946, 1.0
      %v1969 = vadd.f32 %v1948, 1.0
      %v1970 = vadd.f32 %v1950, 1.0
      %v1971 = vadd.f32 %v1952, 1.0
      %v1972 = vadd.f32 %v1954, 1.0
      %v1973 = vadd.f32 %v1956, 1.0
      %v1974 = vadd.f32 %v1958, 1.0
      %v1975 = vadd.f32 %v1960, 1.0
      %v1976 = vadd.f32 %v1962, 1.0
      %v1977 = vadd.f32 %v1964, 1.0
      %v1978 = vadd.f32 %v1966, 1.0
      %v1979 = vrcp.pop %v1967
      %v1980 = vmul.f32 1.0, %v1979
      %v1981 = vrcp.pop %v1968
      %v1982 = vmul.f32 1.0, %v1981
      %v1983 = vrcp.pop %v1969
      %v1984 = vmul.f32 1.0, %v1983
      %v1985 = vrcp.pop %v1970
      %v1986 = vmul.f32 1.0, %v1985
      %v1987 = vrcp.pop %v1971
      %v1988 = vmul.f32 1.0, %v1987
      %v1989 = vrcp.pop %v1972
      %v1990 = vmul.f32 1.0, %v1989
      %v1991 = vrcp.pop %v1973
      %v1992 = vmul.f32 1.0, %v1991
      %v1993 = vrcp.pop %v1974
      %v1994 = vmul.f32 1.0, %v1993
      %v1995 = vrcp.pop %v1975
      %v1996 = vmul.f32 1.0, %v1995
      %v1997 = vrcp.pop %v1976
      %v1998 = vmul.f32 1.0, %v1997
      %v1999 = vrcp.pop %v1977
      %v2000 = vmul.f32 1.0, %v1999
      %v2001 = vrcp.pop %v1978
      %v2002 = vmul.f32 1.0, %v2001
      %v2003 = vmul.f32 %v1804, %v1980
      %v2004 = vmul.f32 %v1807, %v1982
      %v2005 = vmul.f32 %v1812, %v1984
      %v2006 = vmul.f32 %v1815, %v1986
      %v2007 = vmul.f32 %v1820, %v1988
      %v2008 = vmul.f32 %v1823, %v1990
      %v2009 = vmul.f32 %v1828, %v1992
      %v2010 = vmul.f32 %v1831, %v1994
      %v2011 = vmul.f32 %v1836, %v1996
      %v2012 = vmul.f32 %v1839, %v1998
      %v2013 = vmul.f32 %v1844, %v2000
      %v2014 = vmul.f32 %v1847, %v2002
      %v2015 = vpack.c.bf16 %v2004, %v2003
      %v2016 = vpack.c.bf16 %v2006, %v2005
      %v2017 = vpack.c.bf16 %v2008, %v2007
      %v2018 = vpack.c.bf16 %v2010, %v2009
      %v2019 = vpack.c.bf16 %v2012, %v2011
      %v2020 = vpack.c.bf16 %v2014, %v2013
      %2021 = vmatprep.subr.bf16.mxu0 0
      %2022 = vmatpush1.bf16.msra.mxu0 0
      %2023 = vmatprep.subr.bf16.mxu0 0
      %2024 = vmatpush1.bf16.msra.mxu0 0
      %2025 = vmatprep.subr.bf16.mxu0 0
      %2026 = vmatpush1.bf16.msra.mxu0 %v2020
      %2027 = vmatprep.subr.bf16.mxu0 0
      %2028 = vmatpush1.bf16.msra.mxu0 %v2019
      %2029 = vmatprep.subr.bf16.mxu0 0
      %2030 = vmatpush1.bf16.msra.mxu0 %v2018
      %2031 = vmatprep.subr.bf16.mxu0 0
      %2032 = vmatpush1.bf16.msra.mxu0 %v2017
      %2033 = vmatprep.subr.bf16.mxu0 0
      %2034 = vmatpush1.bf16.msra.mxu0 %v2016
      %2035 = vmatprep.subr.bf16.mxu0 0
      %2036 = vmatpush1.bf16.msra.mxu0 %v2015
      %2037 = vmatprep.subr.bf16.mxu0 0
      %2038 = vmatpush2.bf16.msra.mxu0 0
      %2039 = vmatprep.subr.bf16.mxu0 0
      %2040 = vmatpush2.bf16.msra.mxu0 0
      %2041 = vmatprep.subr.bf16.mxu0 0
      %2042 = vmatpush2.bf16.msra.mxu0 0
      %2043 = vmatprep.subr.bf16.mxu0 0
      %2044 = vmatpush2.bf16.msra.mxu0 0
      %2045 = vmatprep.subr.bf16.mxu0 0
      %2046 = vmatpush2.bf16.msra.mxu0 0
      %2047 = vmatprep.subr.bf16.mxu0 0
      %2048 = vmatpush2.bf16.msra.mxu0 0
      %2049 = vmatprep.subr.bf16.mxu0 0
      %2050 = vmatpush2.bf16.msra.mxu0 0
      %2051 = vmatprep.subr.bf16.mxu0 0
      %2052 = vmatpush2.bf16.msra.mxu0 0
      %2053 = vmatprep.mubr.bf16.mxu0 0
      %2054 = vmatmul.mubr.bf16.gmra.mxu0 %v1057
      %v2055 = vpop.f32.mrf.mxu0
      %v2056 = vadd.f32 0.0, %v2055
      %v2057 = vpop.f32.mrf.mxu0
      %v2058 = vpop.f32.mrf.mxu0
      %v2059 = vadd.f32 0.0, %v2058
      %v2060 = vpop.f32.mrf.mxu0
      %2061 = vmatprep.mubr.bf16.mxu0 0
      %2062 = vmatmul.mubr.bf16.gmra.mxu0 %v1060
      %v2063 = vpop.f32.mrf.mxu0
      %v2064 = vadd.f32 0.0, %v2063
      %v2065 = vpop.f32.mrf.mxu0
      %v2066 = vpop.f32.mrf.mxu0
      %v2067 = vadd.f32 0.0, %v2066
      %v2068 = vpop.f32.mrf.mxu0
      %2069 = vdwg.mxu0
      %v2070 = vpack.c.bf16 %v2059, %v2056
      %v2071 = vpack.c.bf16 %v2067, %v2064
      %2072 = vmatprep.subr.bf16.mxu0 0
      %2073 = vmatpush1.bf16.msra.mxu0 0
      %2074 = vmatprep.subr.bf16.mxu0 0
      %2075 = vmatpush1.bf16.msra.mxu0 0
      %2076 = vmatprep.subr.bf16.mxu0 0
      %2077 = vmatpush1.bf16.msra.mxu0 0
      %2078 = vmatprep.subr.bf16.mxu0 0
      %2079 = vmatpush1.bf16.msra.mxu0 0
      %2080 = vmatprep.subr.bf16.mxu0 0
      %2081 = vmatpush1.bf16.msra.mxu0 0
      %2082 = vmatprep.subr.bf16.mxu0 0
      %2083 = vmatpush1.bf16.msra.mxu0 0
      %2084 = vmatprep.subr.bf16.mxu0 0
      %2085 = vmatpush1.bf16.msra.mxu0 %v1122
      %2086 = vmatprep.subr.bf16.mxu0 0
      %2087 = vmatpush1.bf16.msra.mxu0 %v1121
      %2088 = vmatprep.subr.bf16.mxu0 0
      %2089 = vmatpush2.bf16.msra.mxu0 0
      %2090 = vmatprep.subr.bf16.mxu0 0
      %2091 = vmatpush2.bf16.msra.mxu0 0
      %2092 = vmatprep.subr.bf16.mxu0 0
      %2093 = vmatpush2.bf16.msra.mxu0 0
      %2094 = vmatprep.subr.bf16.mxu0 0
      %2095 = vmatpush2.bf16.msra.mxu0 0
      %2096 = vmatprep.subr.bf16.mxu0 0
      %2097 = vmatpush2.bf16.msra.mxu0 0
      %2098 = vmatprep.subr.bf16.mxu0 0
      %2099 = vmatpush2.bf16.msra.mxu0 0
      %2100 = vmatprep.subr.bf16.mxu0 0
      %2101 = vmatpush2.bf16.msra.mxu0 0
      %2102 = vmatprep.subr.bf16.mxu0 0
      %2103 = vmatpush2.bf16.msra.mxu0 0
      %2104 = vmatprep.mubr.bf16.mxu0 0
      %2105 = vmatmul.mubr.bf16.gmra.mxu0 %v1596
      %v2106 = vpop.f32.mrf.mxu0
      %v2107 = vadd.f32 0.0, %v2106
      %v2108 = vpop.f32.mrf.mxu0
      %v2109 = vpop.f32.mrf.mxu0
      %v2110 = vadd.f32 0.0, %v2109
      %v2111 = vpop.f32.mrf.mxu0
      %2112 = vmatprep.mubr.bf16.mxu0 0
      %2113 = vmatmul.mubr.bf16.gmra.mxu0 %v1599
      %v2114 = vpop.f32.mrf.mxu0
      %v2115 = vadd.f32 0.0, %v2114
      %v2116 = vpop.f32.mrf.mxu0
      %v2117 = vpop.f32.mrf.mxu0
      %v2118 = vadd.f32 0.0, %v2117
      %v2119 = vpop.f32.mrf.mxu0
      %2120 = vdwg.mxu0
      %v2122 = vsel %vm549, %v2070, 0
      %v2125 = vsel %vm549, %v2071, 0
      %2127 = vmatprep.subr.bf16.mxu0 0
      %2128 = vmatpush1.bf16.msra.mxu0 0
      %2129 = vmatprep.subr.bf16.mxu0 0
      %2130 = vmatpush1.bf16.msra.mxu0 0
      %2131 = vmatprep.subr.bf16.mxu0 0
      %2132 = vmatpush1.bf16.msra.mxu0 0
      %2133 = vmatprep.subr.bf16.mxu0 0
      %2134 = vmatpush1.bf16.msra.mxu0 0
      %2135 = vmatprep.subr.bf16.mxu0 0
      %2136 = vmatpush1.bf16.msra.mxu0 0
      %2137 = vmatprep.subr.bf16.mxu0 0
      %2138 = vmatpush1.bf16.msra.mxu0 0
      %2139 = vmatprep.subr.bf16.mxu0 0
      %2140 = vmatpush1.bf16.msra.mxu0 %v1183
      %2141 = vmatprep.subr.bf16.mxu0 0
      %2142 = vmatpush1.bf16.msra.mxu0 %v1182
      %2143 = vmatprep.subr.bf16.mxu0 0
      %2144 = vmatpush2.bf16.msra.mxu0 0
      %2145 = vmatprep.subr.bf16.mxu0 0
      %2146 = vmatpush2.bf16.msra.mxu0 0
      %2147 = vmatprep.subr.bf16.mxu0 0
      %2148 = vmatpush2.bf16.msra.mxu0 0
      %2149 = vmatprep.subr.bf16.mxu0 0
      %2150 = vmatpush2.bf16.msra.mxu0 0
      %2151 = vmatprep.subr.bf16.mxu0 0
      %2152 = vmatpush2.bf16.msra.mxu0 0
      %2153 = vmatprep.subr.bf16.mxu0 0
      %2154 = vmatpush2.bf16.msra.mxu0 0
      %2155 = vmatprep.subr.bf16.mxu0 0
      %2156 = vmatpush2.bf16.msra.mxu0 0
      %2157 = vmatprep.subr.bf16.mxu0 0
      %2158 = vmatpush2.bf16.msra.mxu0 0
      %2159 = vmatprep.mubr.bf16.mxu0 0
      %2160 = vmatmul.mubr.bf16.gmra.mxu0 %v2122
      %v2161 = vpop.f32.mrf.mxu0
      %v2162 = vadd.f32 %v2107, %v2161
      %v2163 = vpop.f32.mrf.mxu0
      %v2164 = vpop.f32.mrf.mxu0
      %v2165 = vadd.f32 %v2110, %v2164
      %v2166 = vpop.f32.mrf.mxu0
      %2167 = vmatprep.mubr.bf16.mxu0 0
      %2168 = vmatmul.mubr.bf16.gmra.mxu0 %v2125
      %v2169 = vpop.f32.mrf.mxu0
      %v2170 = vadd.f32 %v2115, %v2169
      %v2171 = vpop.f32.mrf.mxu0
      %v2172 = vpop.f32.mrf.mxu0
      %v2173 = vadd.f32 %v2118, %v2172
      %v2174 = vpop.f32.mrf.mxu0
      %2175 = vdwg.mxu0
      %v2176 = vadd.f32 %v2162, %v1245
      %v2177 = vadd.f32 %v2165, %v1245
      %v2178 = vadd.f32 %v2170, %v1245
      %v2179 = vadd.f32 %v2173, %v1245
      %v2180 = vxor.u32 %v2176, 2147483648
      %v2181 = vxor.u32 %v2177, 2147483648
      %v2182 = vxor.u32 %v2178, 2147483648
      %v2183 = vxor.u32 %v2179, 2147483648
      %v2184 = vmul.f32 %v2180, 1.442695
      %v2185 = vpow.pop %v2184
      %v2186 = vmul.f32 %v2181, 1.442695
      %v2187 = vpow.pop %v2186
      %v2188 = vmul.f32 %v2182, 1.442695
      %v2189 = vpow.pop %v2188
      %v2190 = vmul.f32 %v2183, 1.442695
      %v2191 = vpow.pop %v2190
      %v2192 = vadd.f32 %v2185, 1.0
      %v2193 = vadd.f32 %v2187, 1.0
      %v2194 = vadd.f32 %v2189, 1.0
      %v2195 = vadd.f32 %v2191, 1.0
      %v2196 = vrcp.pop %v2192
      %v2197 = vmul.f32 1.0, %v2196
      %v2198 = vrcp.pop %v2193
      %v2199 = vmul.f32 1.0, %v2198
      %v2200 = vrcp.pop %v2194
      %v2201 = vmul.f32 1.0, %v2200
      %v2202 = vrcp.pop %v2195
      %v2203 = vmul.f32 1.0, %v2202
      %2204 = vmatprep.subr.bf16.mxu0 0
      %2205 = vmatpush1.bf16.msra.mxu0 0
      %2206 = vmatprep.subr.bf16.mxu0 0
      %2207 = vmatpush1.bf16.msra.mxu0 0
      %2208 = vmatprep.subr.bf16.mxu0 0
      %2209 = vmatpush1.bf16.msra.mxu0 0
      %2210 = vmatprep.subr.bf16.mxu0 0
      %2211 = vmatpush1.bf16.msra.mxu0 0
      %2212 = vmatprep.subr.bf16.mxu0 0
      %2213 = vmatpush1.bf16.msra.mxu0 0
      %2214 = vmatprep.subr.bf16.mxu0 0
      %2215 = vmatpush1.bf16.msra.mxu0 0
      %2216 = vmatprep.subr.bf16.mxu0 0
      %2217 = vmatpush1.bf16.msra.mxu0 %v1284
      %2218 = vmatprep.subr.bf16.mxu0 0
      %2219 = vmatpush1.bf16.msra.mxu0 %v1283
      %2220 = vmatprep.subr.bf16.mxu0 0
      %2221 = vmatpush2.bf16.msra.mxu0 0
      %2222 = vmatprep.subr.bf16.mxu0 0
      %2223 = vmatpush2.bf16.msra.mxu0 0
      %2224 = vmatprep.subr.bf16.mxu0 0
      %2225 = vmatpush2.bf16.msra.mxu0 0
      %2226 = vmatprep.subr.bf16.mxu0 0
      %2227 = vmatpush2.bf16.msra.mxu0 0
      %2228 = vmatprep.subr.bf16.mxu0 0
      %2229 = vmatpush2.bf16.msra.mxu0 0
      %2230 = vmatprep.subr.bf16.mxu0 0
      %2231 = vmatpush2.bf16.msra.mxu0 0
      %2232 = vmatprep.subr.bf16.mxu0 0
      %2233 = vmatpush2.bf16.msra.mxu0 0
      %2234 = vmatprep.subr.bf16.mxu0 0
      %2235 = vmatpush2.bf16.msra.mxu0 0
      %2236 = vmatprep.mubr.bf16.mxu0 0
      %2237 = vmatmul.mubr.bf16.gmra.mxu0 %v1596
      %v2238 = vpop.f32.mrf.mxu0
      %v2239 = vadd.f32 0.0, %v2238
      %v2240 = vpop.f32.mrf.mxu0
      %v2241 = vpop.f32.mrf.mxu0
      %v2242 = vadd.f32 0.0, %v2241
      %v2243 = vpop.f32.mrf.mxu0
      %2244 = vmatprep.mubr.bf16.mxu0 0
      %2245 = vmatmul.mubr.bf16.gmra.mxu0 %v1599
      %v2246 = vpop.f32.mrf.mxu0
      %v2247 = vadd.f32 0.0, %v2246
      %v2248 = vpop.f32.mrf.mxu0
      %v2249 = vpop.f32.mrf.mxu0
      %v2250 = vadd.f32 0.0, %v2249
      %v2251 = vpop.f32.mrf.mxu0
      %2252 = vdwg.mxu0
      %2253 = vmatprep.subr.bf16.mxu0 0
      %2254 = vmatpush1.bf16.msra.mxu0 0
      %2255 = vmatprep.subr.bf16.mxu0 0
      %2256 = vmatpush1.bf16.msra.mxu0 0
      %2257 = vmatprep.subr.bf16.mxu0 0
      %2258 = vmatpush1.bf16.msra.mxu0 0
      %2259 = vmatprep.subr.bf16.mxu0 0
      %2260 = vmatpush1.bf16.msra.mxu0 0
      %2261 = vmatprep.subr.bf16.mxu0 0
      %2262 = vmatpush1.bf16.msra.mxu0 0
      %2263 = vmatprep.subr.bf16.mxu0 0
      %2264 = vmatpush1.bf16.msra.mxu0 0
      %2265 = vmatprep.subr.bf16.mxu0 0
      %2266 = vmatpush1.bf16.msra.mxu0 %v1345
      %2267 = vmatprep.subr.bf16.mxu0 0
      %2268 = vmatpush1.bf16.msra.mxu0 %v1344
      %2269 = vmatprep.subr.bf16.mxu0 0
      %2270 = vmatpush2.bf16.msra.mxu0 0
      %2271 = vmatprep.subr.bf16.mxu0 0
      %2272 = vmatpush2.bf16.msra.mxu0 0
      %2273 = vmatprep.subr.bf16.mxu0 0
      %2274 = vmatpush2.bf16.msra.mxu0 0
      %2275 = vmatprep.subr.bf16.mxu0 0
      %2276 = vmatpush2.bf16.msra.mxu0 0
      %2277 = vmatprep.subr.bf16.mxu0 0
      %2278 = vmatpush2.bf16.msra.mxu0 0
      %2279 = vmatprep.subr.bf16.mxu0 0
      %2280 = vmatpush2.bf16.msra.mxu0 0
      %2281 = vmatprep.subr.bf16.mxu0 0
      %2282 = vmatpush2.bf16.msra.mxu0 0
      %2283 = vmatprep.subr.bf16.mxu0 0
      %2284 = vmatpush2.bf16.msra.mxu0 0
      %2285 = vmatprep.mubr.bf16.mxu0 0
      %2286 = vmatmul.mubr.bf16.gmra.mxu0 %v2122
      %v2287 = vpop.f32.mrf.mxu0
      %v2288 = vadd.f32 %v2239, %v2287
      %v2289 = vpop.f32.mrf.mxu0
      %v2290 = vpop.f32.mrf.mxu0
      %v2291 = vadd.f32 %v2242, %v2290
      %v2292 = vpop.f32.mrf.mxu0
      %2293 = vmatprep.mubr.bf16.mxu0 0
      %2294 = vmatmul.mubr.bf16.gmra.mxu0 %v2125
      %v2295 = vpop.f32.mrf.mxu0
      %v2296 = vadd.f32 %v2247, %v2295
      %v2297 = vpop.f32.mrf.mxu0
      %v2298 = vpop.f32.mrf.mxu0
      %v2299 = vadd.f32 %v2250, %v2298
      %v2300 = vpop.f32.mrf.mxu0
      %2301 = vdwg.mxu0
      %v2302 = vadd.f32 %v2288, %v1401
      %v2303 = vadd.f32 %v2291, %v1401
      %v2304 = vadd.f32 %v2296, %v1401
      %v2305 = vadd.f32 %v2299, %v1401
      %v2306 = vxor.u32 %v2302, 2147483648
      %v2307 = vxor.u32 %v2303, 2147483648
      %v2308 = vxor.u32 %v2304, 2147483648
      %v2309 = vxor.u32 %v2305, 2147483648
      %v2310 = vmul.f32 %v2306, 1.442695
      %v2311 = vpow.pop %v2310
      %v2312 = vmul.f32 %v2307, 1.442695
      %v2313 = vpow.pop %v2312
      %v2314 = vmul.f32 %v2308, 1.442695
      %v2315 = vpow.pop %v2314
      %v2316 = vmul.f32 %v2309, 1.442695
      %v2317 = vpow.pop %v2316
      %v2318 = vadd.f32 %v2311, 1.0
      %v2319 = vadd.f32 %v2313, 1.0
      %v2320 = vadd.f32 %v2315, 1.0
      %v2321 = vadd.f32 %v2317, 1.0
      %v2322 = vrcp.pop %v2318
      %v2323 = vmul.f32 1.0, %v2322
      %v2324 = vrcp.pop %v2319
      %v2325 = vmul.f32 1.0, %v2324
      %v2326 = vrcp.pop %v2320
      %v2327 = vmul.f32 1.0, %v2326
      %v2328 = vrcp.pop %v2321
      %v2329 = vmul.f32 1.0, %v2328
      %2330 = vmatprep.subr.bf16.mxu0 0
      %2331 = vmatpush1.bf16.msra.mxu0 0
      %2332 = vmatprep.subr.bf16.mxu0 0
      %2333 = vmatpush1.bf16.msra.mxu0 0
      %2334 = vmatprep.subr.bf16.mxu0 0
      %2335 = vmatpush1.bf16.msra.mxu0 0
      %2336 = vmatprep.subr.bf16.mxu0 0
      %2337 = vmatpush1.bf16.msra.mxu0 0
      %2338 = vmatprep.subr.bf16.mxu0 0
      %2339 = vmatpush1.bf16.msra.mxu0 0
      %2340 = vmatprep.subr.bf16.mxu0 0
      %2341 = vmatpush1.bf16.msra.mxu0 0
      %2342 = vmatprep.subr.bf16.mxu0 0
      %2343 = vmatpush1.bf16.msra.mxu0 %v1446
      %2344 = vmatprep.subr.bf16.mxu0 0
      %2345 = vmatpush1.bf16.msra.mxu0 %v1445
      %2346 = vmatprep.subr.bf16.mxu0 0
      %2347 = vmatpush2.bf16.msra.mxu0 0
      %2348 = vmatprep.subr.bf16.mxu0 0
      %2349 = vmatpush2.bf16.msra.mxu0 0
      %2350 = vmatprep.subr.bf16.mxu0 0
      %2351 = vmatpush2.bf16.msra.mxu0 0
      %2352 = vmatprep.subr.bf16.mxu0 0
      %2353 = vmatpush2.bf16.msra.mxu0 0
      %2354 = vmatprep.subr.bf16.mxu0 0
      %2355 = vmatpush2.bf16.msra.mxu0 0
      %2356 = vmatprep.subr.bf16.mxu0 0
      %2357 = vmatpush2.bf16.msra.mxu0 0
      %2358 = vmatprep.subr.bf16.mxu0 0
      %2359 = vmatpush2.bf16.msra.mxu0 0
      %2360 = vmatprep.subr.bf16.mxu0 0
      %2361 = vmatpush2.bf16.msra.mxu0 0
      %2362 = vmatprep.mubr.bf16.mxu0 0
      %2363 = vmatmul.mubr.bf16.gmra.mxu0 %v2122
      %v2364 = vpop.f32.mrf.mxu0
      %v2365 = vadd.f32 %v1435, %v2364
      %v2366 = vpop.f32.mrf.mxu0
      %v2367 = vpop.f32.mrf.mxu0
      %v2368 = vadd.f32 %v1435, %v2367
      %v2369 = vpop.f32.mrf.mxu0
      %2370 = vmatprep.mubr.bf16.mxu0 0
      %2371 = vmatmul.mubr.bf16.gmra.mxu0 %v2125
      %v2372 = vpop.f32.mrf.mxu0
      %v2373 = vadd.f32 %v1435, %v2372
      %v2374 = vpop.f32.mrf.mxu0
      %v2375 = vpop.f32.mrf.mxu0
      %v2376 = vadd.f32 %v1435, %v2375
      %v2377 = vpop.f32.mrf.mxu0
      %2378 = vdwg.mxu0
      %2379 = vmatprep.subr.bf16.mxu0 0
      %2380 = vmatpush1.bf16.msra.mxu0 0
      %2381 = vmatprep.subr.bf16.mxu0 0
      %2382 = vmatpush1.bf16.msra.mxu0 0
      %2383 = vmatprep.subr.bf16.mxu0 0
      %2384 = vmatpush1.bf16.msra.mxu0 0
      %2385 = vmatprep.subr.bf16.mxu0 0
      %2386 = vmatpush1.bf16.msra.mxu0 0
      %2387 = vmatprep.subr.bf16.mxu0 0
      %2388 = vmatpush1.bf16.msra.mxu0 0
      %2389 = vmatprep.subr.bf16.mxu0 0
      %2390 = vmatpush1.bf16.msra.mxu0 0
      %2391 = vmatprep.subr.bf16.mxu0 0
      %2392 = vmatpush1.bf16.msra.mxu0 %v1513
      %2393 = vmatprep.subr.bf16.mxu0 0
      %2394 = vmatpush1.bf16.msra.mxu0 %v1512
      %2395 = vmatprep.subr.bf16.mxu0 0
      %2396 = vmatpush2.bf16.msra.mxu0 0
      %2397 = vmatprep.subr.bf16.mxu0 0
      %2398 = vmatpush2.bf16.msra.mxu0 0
      %2399 = vmatprep.subr.bf16.mxu0 0
      %2400 = vmatpush2.bf16.msra.mxu0 0
      %2401 = vmatprep.subr.bf16.mxu0 0
      %2402 = vmatpush2.bf16.msra.mxu0 0
      %2403 = vmatprep.subr.bf16.mxu0 0
      %2404 = vmatpush2.bf16.msra.mxu0 0
      %2405 = vmatprep.subr.bf16.mxu0 0
      %2406 = vmatpush2.bf16.msra.mxu0 0
      %2407 = vmatprep.subr.bf16.mxu0 0
      %2408 = vmatpush2.bf16.msra.mxu0 0
      %2409 = vmatprep.subr.bf16.mxu0 0
      %2410 = vmatpush2.bf16.msra.mxu0 0
      %2411 = vmatprep.mubr.bf16.mxu0 0
      %2412 = vmatmul.mubr.bf16.gmra.mxu0 %v1596
      %v2413 = vpop.f32.mrf.mxu0
      %v2414 = vadd.f32 %v1502, %v2413
      %v2415 = vpop.f32.mrf.mxu0
      %v2416 = vpop.f32.mrf.mxu0
      %v2417 = vadd.f32 %v1502, %v2416
      %v2418 = vpop.f32.mrf.mxu0
      %2419 = vmatprep.mubr.bf16.mxu0 0
      %2420 = vmatmul.mubr.bf16.gmra.mxu0 %v1599
      %v2421 = vpop.f32.mrf.mxu0
      %v2422 = vadd.f32 %v1502, %v2421
      %v2423 = vpop.f32.mrf.mxu0
      %v2424 = vpop.f32.mrf.mxu0
      %v2425 = vadd.f32 %v1502, %v2424
      %v2426 = vpop.f32.mrf.mxu0
      %2427 = vdwg.mxu0
      %v2428 = vmul.f32 %v2197, %v2414
      %v2429 = vmul.f32 %v2199, %v2417
      %v2430 = vmul.f32 %v2201, %v2422
      %v2431 = vmul.f32 %v2203, %v2425
      %v2432 = vadd.f32 %v2365, %v2428
      %v2433 = vadd.f32 %v2368, %v2429
      %v2434 = vadd.f32 %v2373, %v2430
      %v2435 = vadd.f32 %v2376, %v2431
      %v2436 = vtanh.pop %v2432
      %v2437 = vtanh.pop %v2433
      %v2438 = vtanh.pop %v2434
      %v2439 = vtanh.pop %v2435
      %v2440 = vsub.f32 1.0, %v2323
      %v2441 = vsub.f32 1.0, %v2325
      %v2442 = vsub.f32 1.0, %v2327
      %v2443 = vsub.f32 1.0, %v2329
      %v2444 = vmul.f32 %v2440, %v2436
      %v2445 = vmul.f32 %v2441, %v2437
      %v2446 = vmul.f32 %v2442, %v2438
      %v2447 = vmul.f32 %v2443, %v2439
      %v2448 = vmul.f32 %v2323, %v1589
      %v2449 = vmul.f32 %v2325, %v1590
      %v2450 = vmul.f32 %v2327, %v1591
      %v2451 = vmul.f32 %v2329, %v1592
      %v2452 = vadd.f32 %v2444, %v2448
      %v2453 = vadd.f32 %v2445, %v2449
      %v2454 = vadd.f32 %v2446, %v2450
      %v2455 = vadd.f32 %v2447, %v2451
    $region62: #{gnn_forward.1} parent=1 // loop_footer
      %s282 = sadd.s32 1, %s278
    $region63: #{gnn_forward.1} parent=1 // loop_footer_branch
      %277 = sbr.rel target = $region59
    $region64: #{gnn_forward.1} parent=1 // loop_exit
      _
    %vm2456 = vcmask 261120
    %2457 = vst.msk [vmem:[#allocation2] sm:$0xff] %vm2456, %v283
    %2458 = vst.msk [vmem:[#allocation2 + $0x8] sm:$0xff] %vm2456, %v284
    %2459 = vst.msk [vmem:[#allocation2 + $0x10] sm:$0xff] %vm2456, %v285
    %2460 = vst.msk [vmem:[#allocation2 + $0x18] sm:$0xff] %vm2456, %v286
    // Predicated region
    $region65: #{gnn_forward.1} parent=1 // pred_check
      _
    $region66: #{gnn_forward.1} parent=1 // pred_check_branch
      %2462 = sbr.rel (0) target = $region68
    $region67: #{gnn_forward.1} parent=1 // pred_region
      %s2464 = ssub.s32 512, 512
      %2465 = vsyncadd [#allocation3], %s2464
      %s2466 = sshll.u32 [#allocation2], 4
      %s2467 = int_to_ptr.vmem [resolvable:$true] %s2466
      %2472 = dma.vmem_to_hbm [thread:$0]  %s2467, 512, %s14, [#allocation3], 128, 128, 8
    $region68: #{gnn_forward.1} parent=1 // pred_fallthru
      _
    // Predicated region
    $region69: #{gnn_forward.1} parent=1 // pred_check
      _
    $region70: #{gnn_forward.1} parent=1 // pred_check_branch
      %2474 = sbr.rel (0) target = $region72
    $region71: #{gnn_forward.1} parent=1 // pred_region
      %2475 = dma.done [#allocation3], 512
    $region72: #{gnn_forward.1} parent=1 // pred_fallthru
      _
    %2476 = vsyncpa [#allocation3], 1

</llo_original>
